<compile_context>
chip_gen: v6e
topology: v6e:2x2x1
jax: 0.10.0
libtpu: 0.0.40
codegen_flags: <defaults>
</compile_context>

<pallas_src>
import functools

import jax
import jax.numpy as jnp
from jax.experimental import pallas as pl
from jax.experimental.pallas import tpu as pltpu


def _warp_kernel(h_ref, pc_ref, img_ref, out_ref, cov_ref, *, src_h_pad, num_ch):
    """Per-(batch, N-tile) plane-homography warp + separable bilinear resampling.

    h_ref   : SMEM (B, 9)             row-major 3x3 homography H_{cam1<-cam2} per batch item
    pc_ref  : VMEM (1, 2, TN)         de-homogenized cam2 pixel coords tile [x; y]
    img_ref : VMEM ((C+1)*Hp, Wp)     bf16 cam1 image + trailing all-ones channel
    out_ref : VMEM (1, C, TN)         warped image tile (cam2 view)
    cov_ref : VMEM (1, 1, TN)         coverage tile (== warp of a ones image)
    """
    b = pl.program_id(0)
    pc = pc_ref[0]                                   # (2, TN)
    px = pc[0:1, :]
    py = pc[1:2, :]

    # Apply homography (cam2 pixel -> cam1 pixel, homogeneous) with SMEM scalars.
    sx = h_ref[b, 0] * px + h_ref[b, 1] * py + h_ref[b, 2]
    sy = h_ref[b, 3] * px + h_ref[b, 4] * py + h_ref[b, 5]
    sz = h_ref[b, 6] * px + h_ref[b, 7] * py + h_ref[b, 8]

    # Degenerate rays (|sz| ~ 0) are rejected by mapping them far out of bounds -> zero weights.
    bad = jnp.abs(sz) < 1e-6
    sz_safe = jnp.where(bad, jnp.float32(1.0), sz)
    inv = pl.reciprocal(sz_safe, approx=True)        # EUP slot
    inv = inv * (2.0 - sz_safe * inv)                # one Newton step -> ~exact f32 reciprocal
    u = jnp.where(bad, jnp.float32(-1e6), sx * inv)  # (1, TN) source x in pixels
    v = jnp.where(bad, jnp.float32(-1e6), sy * inv)  # (1, TN) source y in pixels

    # Separable tent weights (zero padding outside bounds), built at full vreg shape so only the
    # (cheap) sublane broadcast of u/v is needed:
    #   wx[x, n] = relu(1 - |u[n] - x|),  wy[y, n] = relu(1 - |v[n] - y|)
    src_w_pad = img_ref.shape[1]
    tn = px.shape[-1]
    xs = jax.lax.broadcasted_iota(jnp.int32, (src_w_pad, tn), 0).astype(jnp.float32)
    ys = jax.lax.broadcasted_iota(jnp.int32, (src_h_pad, tn), 0).astype(jnp.float32)
    wx = jnp.maximum(0.0, 1.0 - jnp.abs(u - xs))     # (Wp, TN)
    wy = jnp.maximum(0.0, 1.0 - jnp.abs(v - ys))     # (Hp, TN)

    # Stage 1 (MXU): horizontal resample. ((C+1)*Hp, Wp) @ (Wp, TN) -> ((C+1)*Hp, TN), f32 acc.
    tmp = jnp.dot(img_ref[...], wx.astype(jnp.bfloat16),
                  preferred_element_type=jnp.float32)
    # Stage 2: vertical resample with wy; Hp is a multiple of 8 so the reshape is relayout-free.
    tmp = tmp.reshape(num_ch + 1, src_h_pad, tn)     # (C+1, Hp, TN)
    res = jnp.sum(tmp * wy[None, :, :], axis=1)      # (C+1, TN)
    out_ref[...] = res[None, :num_ch, :]             # image channels
    cov_ref[...] = res[None, num_ch:, :]             # ones channel == coverage


def _plane_homographies(cam1_frame, cam1_K, cam2_frame, cam2_K, plane_param):
    """H_{cam1<-cam2} induced by plane n.X + d = 0 (frames are world->camera [R|t])."""
    n = plane_param[0, :3, 0]                                  # (3,)
    d = plane_param[0, 3, 0]                                   # ()
    R1, t1 = cam1_frame[:3, :3], cam1_frame[:3, 3]
    R2, t2 = cam2_frame[:, :3, :3], cam2_frame[:, :3, 3]
    R12 = jnp.einsum("ij,bkj->bik", R1, R2)                    # R1 @ R2^T (cam2 -> cam1)
    t12 = t1[None, :] - jnp.einsum("bij,bj->bi", R12, t2)
    n2 = jnp.einsum("bij,j->bi", R2, n)                        # plane normal in cam2 coords
    d2 = d - jnp.einsum("bi,bi->b", n2, t2)                    # plane offset in cam2 coords
    M = R12 - t12[:, :, None] * n2[:, None, :] / d2[:, None, None]
    K2_inv = jnp.linalg.inv(cam2_K)
    return jnp.einsum("ij,bjk,bkl->bil", cam1_K, M, K2_inv)    # (B, 3, 3)


def warp_imgs_to_plane(img, pixel_coords, cam1_frame, cam1_K, cam2_frame, cam2_K,
                       plane_param, *, out_hw):
    """img: (1, C, Hs, Ws) NCHW; pixel_coords: (B, 3, N) homogeneous.

    Returns (warped (B, C, Ho, Wo) f32, coverage (B, 1, Ho, Wo) f32).
    coverage == warp of a ones image (any channel), used for the mask.
    """
    B = cam2_frame.shape[0]
    _, C, Hs, Ws = img.shape
    N = pixel_coords.shape[-1]
    Ho, Wo = out_hw

    Hmats = _plane_homographies(cam1_frame, cam1_K, cam2_frame, cam2_K, plane_param)
    h_flat = Hmats.reshape(B, 9).astype(jnp.float32)

    # Source padding: width (MXU K, lane dim) to >=128, height (sublane split) to multiple of 8.
    Ws_pad = max(128, pl.cdiv(Ws, 128) * 128)
    Hs_pad = pl.cdiv(Hs, 8) * 8
    # Append an all-ones channel: its warp through the identical pipeline is the coverage.
    img_ones = jnp.concatenate(
        [img[0].astype(jnp.bfloat16),
         jnp.ones((1, Hs, Ws), jnp.bfloat16)], axis=0)                   # (C+1, Hs, Ws)
    img_pad = jnp.zeros((C + 1, Hs_pad, Ws_pad), jnp.bfloat16)
    img_pad = img_pad.at[:, :Hs, :Ws].set(img_ones)
    img_flat = img_pad.reshape((C + 1) * Hs_pad, Ws_pad)

    # De-homogenize pixel coords (drop w row): 1/3 less DMA, 3 fewer multiplies per tile.
    pc_xy = (pixel_coords[:, :2, :] / pixel_coords[:, 2:3, :]).astype(jnp.float32)

    # --- TN selection from an explicit VMEM budget (v7x only has 64 MiB physical VMEM). ---
    n128 = pl.cdiv(N, 128) * 128
    try:
        vmem_cap = int(pltpu.get_tpu_info().vmem_capacity_bytes)
    except Exception:
        vmem_cap = 64 * 1024 * 1024                 # assume the smallest (v7x per-core)
    vmem_limit = min(vmem_cap * 3 // 4, 96 * 1024 * 1024)   # 96 MiB on v5e/v6e, 48 MiB on v7x
    img_bytes = img_flat.size * 2                   # bf16, single-buffered
    per_lane = (2 * 2 * 4                           # pc, double-buffered
                + Ws_pad * (4 + 2 + 4)              # wx f32 + bf16 cast + xs iota
                + Hs_pad * (4 + 4)                  # wy f32 + ys iota
                + (C + 1) * Hs_pad * 4              # stage-1 f32 result
                + 2 * (C + 1) * 4)                  # out + cov, double-buffered
    budget = vmem_limit - img_bytes - (8 << 20)     # headroom for compiler scratch
    tn_cap = max(256, (budget // per_lane) // 256 * 256) if budget > 0 else 256
    if n128 <= min(2048, tn_cap):
        TN = n128                                   # whole row set in one tile, no pad waste
    else:
        TN = min(2048, tn_cap)                      # multiple of 256 for the 256-wide MXU
    # Keep both v7x TensorCores busy: if B == 1, split the N axis into >= 2 tiles when possible.
    if B == 1 and n128 // TN < 2 and n128 >= 256:
        TN = max(128, ((n128 // 2) // 128) * 128)
    N_pad = pl.cdiv(N, TN) * TN
    if N_pad != N:
        pc_xy = jnp.concatenate(
            [pc_xy, jnp.zeros((B, 2, N_pad - N), jnp.float32)], axis=-1)

    kernel = functools.partial(_warp_kernel, src_h_pad=Hs_pad, num_ch=C)

    def _run(single_buffer_img):
        if single_buffer_img:
            # Constant index_map -> never re-DMA'd; 1-deep pipeline halves its VMEM residency.
            img_spec = pl.BlockSpec(((C + 1) * Hs_pad, Ws_pad), lambda b, n: (0, 0),
                                    pipeline_mode=pl.Buffered(1))
        else:
            img_spec = pl.BlockSpec(((C + 1) * Hs_pad, Ws_pad), lambda b, n: (0, 0))
        return pl.pallas_call(
            kernel,
            out_shape=(jax.ShapeDtypeStruct((B, C, N_pad), jnp.float32),
                       jax.ShapeDtypeStruct((B, 1, N_pad), jnp.float32)),
            grid=(B, N_pad // TN),
            in_specs=[
                pl.BlockSpec(memory_space=pltpu.MemorySpace.SMEM),    # homographies (B, 9)
                pl.BlockSpec((1, 2, TN), lambda b, n: (b, 0, n)),     # pixel coord tile
                img_spec,                                             # cam1 image (shared)
            ],
            out_specs=(
                pl.BlockSpec((1, C, TN), lambda b, n: (b, 0, n)),     # warped tile
                pl.BlockSpec((1, 1, TN), lambda b, n: (b, 0, n)),     # coverage tile
            ),
            compiler_params=pltpu.CompilerParams(
                dimension_semantics=("parallel", "parallel"),
                vmem_limit_bytes=int(vmem_limit)),
        )(h_flat, pc_xy, img_flat)

    try:
        warped, cov = _run(True)
    except Exception:
        # Fallback for jax versions that reject a 1-deep pipeline on a BlockSpec.
        warped, cov = _run(False)

    warped = warped[:, :, :N].reshape(B, C, Ho, Wo)
    cov = cov[:, :, :N].reshape(B, 1, Ho, Wo)
    return warped, cov


class WarpModel:
    """JAX/Pallas equivalent of the PyTorch WarpModel."""

    def __init__(self, img_shape):
        C, H, W = img_shape
        # nn.Parameter(zeros + 0.5).unsqueeze(0)
        self.img_data = jnp.zeros((1, C, H, W), jnp.float32) + 0.5
        self.mask = None
        self.cam1_frame = jnp.eye(4, dtype=jnp.float32)
        # The PyTorch module hardcodes full-res (1920x1080) intrinsics (f=2400, c=(959.5,539.5));
        # scaled here to the small synthetic image so the warp is non-degenerate.
        f = 20.0
        self.cam1_K = jnp.array([[f, 0.0, (W - 1) / 2.0],
                                 [0.0, f, (H - 1) / 2.0],
                                 [0.0, 0.0, 1.0]], jnp.float32)
        self.plane_param = jnp.array([[0.0, 0.0, -1.0, 2.5]], jnp.float32)[:, :, None]  # (1,4,1)

    def forward(self, batched_X, *, out_hw):
        cam2_frame, cam2_K, pixel_coords = batched_X
        warped, coverage = warp_imgs_to_plane(self.img_data, pixel_coords, self.cam1_frame,
                                              self.cam1_K, cam2_frame, cam2_K,
                                              self.plane_param, out_hw=out_hw)
        if self.mask is None:
            # Same semantics as warp(ones_like(img)) != 0 — the fused ones-channel output equals
            # the warp of a ones image, so no second warp pass is needed.
            self.mask = jnp.broadcast_to(coverage != 0, warped.shape)
        return warped


if __name__ == "__main__":
    key = jax.random.PRNGKey(0)
    C, Hs, Ws = 4, 16, 16       # img_shape = [C, H, W]
    Ho, Wo = 16, 16             # target (cam2) image size
    B = 2                       # batch of camera-2 views

    model = WarpModel((C, Hs, Ws))

    # Batched cam2 extrinsics: identity rotation + small random translation.
    t = 0.1 * jax.random.normal(key, (B, 3), dtype=jnp.float32)
    cam2_frame = jnp.tile(jnp.eye(4, dtype=jnp.float32)[None], (B, 1, 1))
    cam2_frame = cam2_frame.at[:, :3, 3].set(t)
    cam2_K = jnp.tile(model.cam1_K[None], (B, 1, 1))

    # Homogeneous pixel grid of the target image, flattened row-major (n = y*Wo + x).
    yy, xx = jnp.meshgrid(jnp.arange(Ho, dtype=jnp.float32),
                          jnp.arange(Wo, dtype=jnp.float32), indexing="ij")
    pc = jnp.stack([xx.reshape(-1), yy.reshape(-1),
                    jnp.ones(Ho * Wo, jnp.float32)], axis=0)       # (3, N)
    pixel_coords = jnp.tile(pc[None], (B, 1, 1))                   # (B, 3, N)

    warped = model.forward((cam2_frame, cam2_K, pixel_coords), out_hw=(Ho, Wo))
    warped = jax.block_until_ready(warped)
    assert warped.shape == (B, C, Ho, Wo) and warped.dtype == jnp.float32
    assert model.mask.shape == (B, C, Ho, Wo)
    assert bool(jnp.all(jnp.isfinite(warped)))
    print("KERNEL_OK")
</pallas_src>

<mosaic_0001>
module attributes {stable_mosaic.version = 11 : i64} {
  func.func @_warp_kernel(%arg0: i32, %arg1: i32, %arg2: memref<2x9xf32, #tpu.memory_space<smem>>, %arg3: memref<1x2x256xf32, #tpu.memory_space<vmem>>, %arg4: memref<80x128xbf16, #tpu.memory_space<vmem>>, %arg5: memref<1x4x256xf32, #tpu.memory_space<vmem>>, %arg6: memref<1x1x256xf32, #tpu.memory_space<vmem>>) attributes {dimension_semantics = [#tpu.dimension_semantics<parallel>, #tpu.dimension_semantics<parallel>], iteration_bounds = array<i64: 2, 1>, scalar_prefetch = 0 : i64, scratch_operands = 0 : i64, tpu.core_type = #tpu.core_type<tc>, window_params = [{transform_indices = @transform_0, window_bounds = array<i64: 2, 9>}, {transform_indices = @transform_1, window_bounds = array<i64: 1, 2, 256>}, {pipeline_mode = #tpu.pipeline_mode<synchronous>, transform_indices = @transform_2, window_bounds = array<i64: 80, 128>}, {transform_indices = @transform_3, window_bounds = array<i64: 1, 4, 256>}, {transform_indices = @transform_4, window_bounds = array<i64: 1, 1, 256>}]} {
    %c0 = arith.constant 0 : index
    %c0_0 = arith.constant 0 : index
    %c0_1 = arith.constant 0 : index
    %0 = vector.load %arg3[%c0, %c0_0, %c0_1] : memref<1x2x256xf32, #tpu.memory_space<vmem>>, vector<1x2x256xf32>
    %1 = vector.shape_cast %0 : vector<1x2x256xf32> to vector<2x256xf32>
    %2 = vector.extract_strided_slice %1 {offsets = [0, 0], sizes = [1, 256], strides = [1, 1]} : vector<2x256xf32> to vector<1x256xf32>
    %3 = vector.extract_strided_slice %1 {offsets = [1, 0], sizes = [1, 256], strides = [1, 1]} : vector<2x256xf32> to vector<1x256xf32>
    %4 = arith.index_cast %arg0 : i32 to index
    %c0_2 = arith.constant 0 : index
    %5 = memref.load %arg2[%4, %c0_2] : memref<2x9xf32, #tpu.memory_space<smem>>
    %6 = vector.broadcast %5 : f32 to vector<1x256xf32>
    %7 = arith.mulf %6, %2 : vector<1x256xf32>
    %8 = arith.index_cast %arg0 : i32 to index
    %c1 = arith.constant 1 : index
    %9 = memref.load %arg2[%8, %c1] : memref<2x9xf32, #tpu.memory_space<smem>>
    %10 = vector.broadcast %9 : f32 to vector<1x256xf32>
    %11 = arith.mulf %10, %3 : vector<1x256xf32>
    %12 = arith.addf %7, %11 : vector<1x256xf32>
    %13 = arith.index_cast %arg0 : i32 to index
    %c2 = arith.constant 2 : index
    %14 = memref.load %arg2[%13, %c2] : memref<2x9xf32, #tpu.memory_space<smem>>
    %15 = vector.broadcast %14 : f32 to vector<1x256xf32>
    %16 = arith.addf %12, %15 : vector<1x256xf32>
    %17 = arith.index_cast %arg0 : i32 to index
    %c3 = arith.constant 3 : index
    %18 = memref.load %arg2[%17, %c3] : memref<2x9xf32, #tpu.memory_space<smem>>
    %19 = vector.broadcast %18 : f32 to vector<1x256xf32>
    %20 = arith.mulf %19, %2 : vector<1x256xf32>
    %21 = arith.index_cast %arg0 : i32 to index
    %c4 = arith.constant 4 : index
    %22 = memref.load %arg2[%21, %c4] : memref<2x9xf32, #tpu.memory_space<smem>>
    %23 = vector.broadcast %22 : f32 to vector<1x256xf32>
    %24 = arith.mulf %23, %3 : vector<1x256xf32>
    %25 = arith.addf %20, %24 : vector<1x256xf32>
    %26 = arith.index_cast %arg0 : i32 to index
    %c5 = arith.constant 5 : index
    %27 = memref.load %arg2[%26, %c5] : memref<2x9xf32, #tpu.memory_space<smem>>
    %28 = vector.broadcast %27 : f32 to vector<1x256xf32>
    %29 = arith.addf %25, %28 : vector<1x256xf32>
    %30 = arith.index_cast %arg0 : i32 to index
    %c6 = arith.constant 6 : index
    %31 = memref.load %arg2[%30, %c6] : memref<2x9xf32, #tpu.memory_space<smem>>
    %32 = vector.broadcast %31 : f32 to vector<1x256xf32>
    %33 = arith.mulf %32, %2 : vector<1x256xf32>
    %34 = arith.index_cast %arg0 : i32 to index
    %c7 = arith.constant 7 : index
    %35 = memref.load %arg2[%34, %c7] : memref<2x9xf32, #tpu.memory_space<smem>>
    %36 = vector.broadcast %35 : f32 to vector<1x256xf32>
    %37 = arith.mulf %36, %3 : vector<1x256xf32>
    %38 = arith.addf %33, %37 : vector<1x256xf32>
    %39 = arith.index_cast %arg0 : i32 to index
    %c8 = arith.constant 8 : index
    %40 = memref.load %arg2[%39, %c8] : memref<2x9xf32, #tpu.memory_space<smem>>
    %41 = vector.broadcast %40 : f32 to vector<1x256xf32>
    %42 = arith.addf %38, %41 : vector<1x256xf32>
    %43 = math.absf %42 : vector<1x256xf32>
    %cst = arith.constant 9.99999997E-7 : f32
    %44 = vector.broadcast %cst : f32 to vector<1x256xf32>
    %45 = arith.cmpf olt, %43, %44 : vector<1x256xf32>
    %cst_3 = arith.constant 1.000000e+00 : f32
    %46 = vector.broadcast %cst_3 : f32 to vector<1x256xf32>
    %47 = arith.select %45, %46, %42 : vector<1x256xi1>, vector<1x256xf32>
    %48 = tpu.reciprocal %47 {approx = true} : vector<1x256xf32> -> vector<1x256xf32>
    %49 = arith.mulf %47, %48 : vector<1x256xf32>
    %cst_4 = arith.constant 2.000000e+00 : f32
    %50 = vector.broadcast %cst_4 : f32 to vector<1x256xf32>
    %51 = arith.subf %50, %49 : vector<1x256xf32>
    %52 = arith.mulf %48, %51 : vector<1x256xf32>
    %53 = arith.mulf %16, %52 : vector<1x256xf32>
    %cst_5 = arith.constant -1.000000e+06 : f32
    %54 = vector.broadcast %cst_5 : f32 to vector<1x256xf32>
    %55 = arith.select %45, %54, %53 : vector<1x256xi1>, vector<1x256xf32>
    %56 = arith.mulf %29, %52 : vector<1x256xf32>
    %cst_6 = arith.constant -1.000000e+06 : f32
    %57 = vector.broadcast %cst_6 : f32 to vector<1x256xf32>
    %58 = arith.select %45, %57, %56 : vector<1x256xi1>, vector<1x256xf32>
    %59 = tpu.iota {dimensions = array<i32: 0>} : vector<128x256xi32>
    %60 = arith.sitofp %59 : vector<128x256xi32> to vector<128x256xf32>
    %61 = tpu.iota {dimensions = array<i32: 0>} : vector<16x256xi32>
    %62 = arith.sitofp %61 : vector<16x256xi32> to vector<16x256xf32>
    %63 = vector.broadcast %55 : vector<1x256xf32> to vector<128x256xf32>
    %64 = arith.subf %63, %60 : vector<128x256xf32>
    %65 = math.absf %64 : vector<128x256xf32>
    %cst_7 = arith.constant 1.000000e+00 : f32
    %66 = vector.broadcast %cst_7 : f32 to vector<128x256xf32>
    %67 = arith.subf %66, %65 : vector<128x256xf32>
    %cst_8 = arith.constant 0.000000e+00 : f32
    %68 = vector.broadcast %cst_8 : f32 to vector<128x256xf32>
    %69 = arith.maximumf %68, %67 : vector<128x256xf32>
    %70 = vector.broadcast %58 : vector<1x256xf32> to vector<16x256xf32>
    %71 = arith.subf %70, %62 : vector<16x256xf32>
    %72 = math.absf %71 : vector<16x256xf32>
    %cst_9 = arith.constant 1.000000e+00 : f32
    %73 = vector.broadcast %cst_9 : f32 to vector<16x256xf32>
    %74 = arith.subf %73, %72 : vector<16x256xf32>
    %cst_10 = arith.constant 0.000000e+00 : f32
    %75 = vector.broadcast %cst_10 : f32 to vector<16x256xf32>
    %76 = arith.maximumf %75, %74 : vector<16x256xf32>
    %c0_11 = arith.constant 0 : index
    %c0_12 = arith.constant 0 : index
    %77 = vector.load %arg4[%c0_11, %c0_12] : memref<80x128xbf16, #tpu.memory_space<vmem>>, vector<80x128xbf16>
    %78 = arith.truncf %69 : vector<128x256xf32> to vector<128x256xbf16>
    %cst_13 = arith.constant dense<0.000000e+00> : vector<80x256xf32>
    %79 = tpu.matmul %77, %78, %cst_13 {dimension_numbers = #tpu.dot_dimension_numbers<[1], [0], [0], [1], [0, 0, 1, 1], [], []>} : vector<80x128xbf16>, vector<128x256xbf16>, vector<80x256xf32> -> vector<80x256xf32>
    %80 = vector.shape_cast %79 : vector<80x256xf32> to vector<5x16x256xf32>
    %81 = vector.shape_cast %76 : vector<16x256xf32> to vector<1x16x256xf32>
    %82 = vector.broadcast %81 : vector<1x16x256xf32> to vector<5x16x256xf32>
    %83 = arith.mulf %80, %82 : vector<5x16x256xf32>
    %cst_14 = arith.constant dense<0.000000e+00> : vector<5x256xf32>
    %84 = vector.multi_reduction <add>, %83, %cst_14 [1] : vector<5x16x256xf32> to vector<5x256xf32>
    %85 = vector.extract_strided_slice %84 {offsets = [0, 0], sizes = [4, 256], strides = [1, 1]} : vector<5x256xf32> to vector<4x256xf32>
    %86 = vector.shape_cast %85 : vector<4x256xf32> to vector<1x4x256xf32>
    %c0_15 = arith.constant 0 : index
    %c0_16 = arith.constant 0 : index
    %c0_17 = arith.constant 0 : index
    %87 = vector.load %arg5[%c0_15, %c0_16, %c0_17] : memref<1x4x256xf32, #tpu.memory_space<vmem>>, vector<1x4x256xf32>
    tpu.vector_store %arg5[%c0_15, %c0_16, %c0_17], %86 {strides = array<i32>} : memref<1x4x256xf32, #tpu.memory_space<vmem>>, vector<1x4x256xf32>,
    %88 = vector.extract_strided_slice %84 {offsets = [4, 0], sizes = [1, 256], strides = [1, 1]} : vector<5x256xf32> to vector<1x256xf32>
    %89 = vector.shape_cast %88 : vector<1x256xf32> to vector<1x1x256xf32>
    %c0_18 = arith.constant 0 : index
    %c0_19 = arith.constant 0 : index
    %c0_20 = arith.constant 0 : index
    %90 = vector.load %arg6[%c0_18, %c0_19, %c0_20] : memref<1x1x256xf32, #tpu.memory_space<vmem>>, vector<1x1x256xf32>
    tpu.vector_store %arg6[%c0_18, %c0_19, %c0_20], %89 {strides = array<i32>} : memref<1x1x256xf32, #tpu.memory_space<vmem>>, vector<1x1x256xf32>,
    return
  }
  func.func @transform_0(%arg0: i32, %arg1: i32) -> (i32, i32) {
    %c0_i32 = arith.constant 0 : i32
    %c0_i32_0 = arith.constant 0 : i32
    %c0_i32_1 = arith.constant 0 : i32
    return %c0_i32, %c0_i32_0 : i32, i32
  }
  func.func @transform_1(%arg0: i32, %arg1: i32) -> (i32, i32, i32) {
    %c0_i32 = arith.constant 0 : i32
    %c0_i32_0 = arith.constant 0 : i32
    return %arg0, %c0_i32, %arg1 : i32, i32, i32
  }
  func.func @transform_2(%arg0: i32, %arg1: i32) -> (i32, i32) {
    %c0_i32 = arith.constant 0 : i32
    %c0_i32_0 = arith.constant 0 : i32
    %c0_i32_1 = arith.constant 0 : i32
    return %c0_i32, %c0_i32_0 : i32, i32
  }
  func.func @transform_3(%arg0: i32, %arg1: i32) -> (i32, i32, i32) {
    %c0_i32 = arith.constant 0 : i32
    %c0_i32_0 = arith.constant 0 : i32
    return %arg0, %c0_i32, %arg1 : i32, i32, i32
  }
  func.func @transform_4(%arg0: i32, %arg1: i32) -> (i32, i32, i32) {
    %c0_i32 = arith.constant 0 : i32
    %c0_i32_0 = arith.constant 0 : i32
    return %arg0, %c0_i32, %arg1 : i32, i32, i32
  }
}

module attributes {stable_mosaic.version = 11 : i64} {
  func.func @_warp_kernel(%arg0: i32, %arg1: i32, %arg2: memref<2x9xf32, #tpu.memory_space<smem>>, %arg3: memref<1x2x256xf32, #tpu.memory_space<vmem>>, %arg4: memref<80x128xbf16, #tpu.memory_space<vmem>>, %arg5: memref<1x4x256xf32, #tpu.memory_space<vmem>>, %arg6: memref<1x1x256xf32, #tpu.memory_space<vmem>>) attributes {dimension_semantics = [#tpu.dimension_semantics<parallel>, #tpu.dimension_semantics<parallel>], iteration_bounds = array<i64: 2, 1>, scalar_prefetch = 0 : i64, scratch_operands = 0 : i64, tpu.core_type = #tpu.core_type<tc>, window_params = [{transform_indices = @transform_0, window_bounds = array<i64: 2, 9>}, {transform_indices = @transform_1, window_bounds = array<i64: 1, 2, 256>}, {pipeline_mode = #tpu.pipeline_mode<synchronous>, transform_indices = @transform_2, window_bounds = array<i64: 80, 128>}, {transform_indices = @transform_3, window_bounds = array<i64: 1, 4, 256>}, {transform_indices = @transform_4, window_bounds = array<i64: 1, 1, 256>}]} {
    %c0 = arith.constant 0 : index
    %c0_0 = arith.constant 0 : index
    %c0_1 = arith.constant 0 : index
    %0 = vector.load %arg3[%c0, %c0_0, %c0_1] : memref<1x2x256xf32, #tpu.memory_space<vmem>>, vector<1x2x256xf32>
    %1 = vector.shape_cast %0 : vector<1x2x256xf32> to vector<2x256xf32>
    %2 = vector.extract_strided_slice %1 {offsets = [0, 0], sizes = [1, 256], strides = [1, 1]} : vector<2x256xf32> to vector<1x256xf32>
    %3 = vector.extract_strided_slice %1 {offsets = [1, 0], sizes = [1, 256], strides = [1, 1]} : vector<2x256xf32> to vector<1x256xf32>
    %4 = arith.index_cast %arg0 : i32 to index
    %c0_2 = arith.constant 0 : index
    %5 = memref.load %arg2[%4, %c0_2] : memref<2x9xf32, #tpu.memory_space<smem>>
    %6 = vector.broadcast %5 : f32 to vector<1x256xf32>
    %7 = arith.mulf %6, %2 : vector<1x256xf32>
    %8 = arith.index_cast %arg0 : i32 to index
    %c1 = arith.constant 1 : index
    %9 = memref.load %arg2[%8, %c1] : memref<2x9xf32, #tpu.memory_space<smem>>
    %10 = vector.broadcast %9 : f32 to vector<1x256xf32>
    %11 = arith.mulf %10, %3 : vector<1x256xf32>
    %12 = arith.addf %7, %11 : vector<1x256xf32>
    %13 = arith.index_cast %arg0 : i32 to index
    %c2 = arith.constant 2 : index
    %14 = memref.load %arg2[%13, %c2] : memref<2x9xf32, #tpu.memory_space<smem>>
    %15 = vector.broadcast %14 : f32 to vector<1x256xf32>
    %16 = arith.addf %12, %15 : vector<1x256xf32>
    %17 = arith.index_cast %arg0 : i32 to index
    %c3 = arith.constant 3 : index
    %18 = memref.load %arg2[%17, %c3] : memref<2x9xf32, #tpu.memory_space<smem>>
    %19 = vector.broadcast %18 : f32 to vector<1x256xf32>
    %20 = arith.mulf %19, %2 : vector<1x256xf32>
    %21 = arith.index_cast %arg0 : i32 to index
    %c4 = arith.constant 4 : index
    %22 = memref.load %arg2[%21, %c4] : memref<2x9xf32, #tpu.memory_space<smem>>
    %23 = vector.broadcast %22 : f32 to vector<1x256xf32>
    %24 = arith.mulf %23, %3 : vector<1x256xf32>
    %25 = arith.addf %20, %24 : vector<1x256xf32>
    %26 = arith.index_cast %arg0 : i32 to index
    %c5 = arith.constant 5 : index
    %27 = memref.load %arg2[%26, %c5] : memref<2x9xf32, #tpu.memory_space<smem>>
    %28 = vector.broadcast %27 : f32 to vector<1x256xf32>
    %29 = arith.addf %25, %28 : vector<1x256xf32>
    %30 = arith.index_cast %arg0 : i32 to index
    %c6 = arith.constant 6 : index
    %31 = memref.load %arg2[%30, %c6] : memref<2x9xf32, #tpu.memory_space<smem>>
    %32 = vector.broadcast %31 : f32 to vector<1x256xf32>
    %33 = arith.mulf %32, %2 : vector<1x256xf32>
    %34 = arith.index_cast %arg0 : i32 to index
    %c7 = arith.constant 7 : index
    %35 = memref.load %arg2[%34, %c7] : memref<2x9xf32, #tpu.memory_space<smem>>
    %36 = vector.broadcast %35 : f32 to vector<1x256xf32>
    %37 = arith.mulf %36, %3 : vector<1x256xf32>
    %38 = arith.addf %33, %37 : vector<1x256xf32>
    %39 = arith.index_cast %arg0 : i32 to index
    %c8 = arith.constant 8 : index
    %40 = memref.load %arg2[%39, %c8] : memref<2x9xf32, #tpu.memory_space<smem>>
    %41 = vector.broadcast %40 : f32 to vector<1x256xf32>
    %42 = arith.addf %38, %41 : vector<1x256xf32>
    %43 = math.absf %42 : vector<1x256xf32>
    %cst = arith.constant 9.99999997E-7 : f32
    %44 = vector.broadcast %cst : f32 to vector<1x256xf32>
    %45 = arith.cmpf olt, %43, %44 : vector<1x256xf32>
    %cst_3 = arith.constant 1.000000e+00 : f32
    %46 = vector.broadcast %cst_3 : f32 to vector<1x256xf32>
    %47 = arith.select %45, %46, %42 : vector<1x256xi1>, vector<1x256xf32>
    %48 = tpu.reciprocal %47 {approx = true} : vector<1x256xf32> -> vector<1x256xf32>
    %49 = arith.mulf %47, %48 : vector<1x256xf32>
    %cst_4 = arith.constant 2.000000e+00 : f32
    %50 = vector.broadcast %cst_4 : f32 to vector<1x256xf32>
    %51 = arith.subf %50, %49 : vector<1x256xf32>
    %52 = arith.mulf %48, %51 : vector<1x256xf32>
    %53 = arith.mulf %16, %52 : vector<1x256xf32>
    %cst_5 = arith.constant -1.000000e+06 : f32
    %54 = vector.broadcast %cst_5 : f32 to vector<1x256xf32>
    %55 = arith.select %45, %54, %53 : vector<1x256xi1>, vector<1x256xf32>
    %56 = arith.mulf %29, %52 : vector<1x256xf32>
    %cst_6 = arith.constant -1.000000e+06 : f32
    %57 = vector.broadcast %cst_6 : f32 to vector<1x256xf32>
    %58 = arith.select %45, %57, %56 : vector<1x256xi1>, vector<1x256xf32>
    %59 = tpu.iota {dimensions = array<i32: 0>} : vector<128x256xi32>
    %60 = arith.sitofp %59 : vector<128x256xi32> to vector<128x256xf32>
    %61 = tpu.iota {dimensions = array<i32: 0>} : vector<16x256xi32>
    %62 = arith.sitofp %61 : vector<16x256xi32> to vector<16x256xf32>
    %63 = vector.broadcast %55 : vector<1x256xf32> to vector<128x256xf32>
    %64 = arith.subf %63, %60 : vector<128x256xf32>
    %65 = math.absf %64 : vector<128x256xf32>
    %cst_7 = arith.constant 1.000000e+00 : f32
    %66 = vector.broadcast %cst_7 : f32 to vector<128x256xf32>
    %67 = arith.subf %66, %65 : vector<128x256xf32>
    %cst_8 = arith.constant 0.000000e+00 : f32
    %68 = vector.broadcast %cst_8 : f32 to vector<128x256xf32>
    %69 = arith.maximumf %68, %67 : vector<128x256xf32>
    %70 = vector.broadcast %58 : vector<1x256xf32> to vector<16x256xf32>
    %71 = arith.subf %70, %62 : vector<16x256xf32>
    %72 = math.absf %71 : vector<16x256xf32>
    %cst_9 = arith.constant 1.000000e+00 : f32
    %73 = vector.broadcast %cst_9 : f32 to vector<16x256xf32>
    %74 = arith.subf %73, %72 : vector<16x256xf32>
    %cst_10 = arith.constant 0.000000e+00 : f32
    %75 = vector.broadcast %cst_10 : f32 to vector<16x256xf32>
    %76 = arith.maximumf %75, %74 : vector<16x256xf32>
    %c0_11 = arith.constant 0 : index
    %c0_12 = arith.constant 0 : index
    %77 = vector.load %arg4[%c0_11, %c0_12] : memref<80x128xbf16, #tpu.memory_space<vmem>>, vector<80x128xbf16>
    %78 = arith.truncf %69 : vector<128x256xf32> to vector<128x256xbf16>
    %cst_13 = arith.constant dense<0.000000e+00> : vector<80x256xf32>
    %79 = tpu.matmul %77, %78, %cst_13 {dimension_numbers = #tpu.dot_dimension_numbers<[1], [0], [0], [1], [0, 0, 1, 1], [], []>} : vector<80x128xbf16>, vector<128x256xbf16>, vector<80x256xf32> -> vector<80x256xf32>
    %80 = vector.shape_cast %79 : vector<80x256xf32> to vector<5x16x256xf32>
    %81 = vector.shape_cast %76 : vector<16x256xf32> to vector<1x16x256xf32>
    %82 = vector.broadcast %81 : vector<1x16x256xf32> to vector<5x16x256xf32>
    %83 = arith.mulf %80, %82 : vector<5x16x256xf32>
    %cst_14 = arith.constant dense<0.000000e+00> : vector<5x256xf32>
    %84 = vector.multi_reduction <add>, %83, %cst_14 [1] : vector<5x16x256xf32> to vector<5x256xf32>
    %85 = vector.extract_strided_slice %84 {offsets = [0, 0], sizes = [4, 256], strides = [1, 1]} : vector<5x256xf32> to vector<4x256xf32>
    %86 = vector.shape_cast %85 : vector<4x256xf32> to vector<1x4x256xf32>
    %c0_15 = arith.constant 0 : index
    %c0_16 = arith.constant 0 : index
    %c0_17 = arith.constant 0 : index
    %87 = vector.load %arg5[%c0_15, %c0_16, %c0_17] : memref<1x4x256xf32, #tpu.memory_space<vmem>>, vector<1x4x256xf32>
    tpu.vector_store %arg5[%c0_15, %c0_16, %c0_17], %86 {strides = array<i32>} : memref<1x4x256xf32, #tpu.memory_space<vmem>>, vector<1x4x256xf32>,
    %88 = vector.extract_strided_slice %84 {offsets = [4, 0], sizes = [1, 256], strides = [1, 1]} : vector<5x256xf32> to vector<1x256xf32>
    %89 = vector.shape_cast %88 : vector<1x256xf32> to vector<1x1x256xf32>
    %c0_18 = arith.constant 0 : index
    %c0_19 = arith.constant 0 : index
    %c0_20 = arith.constant 0 : index
    %90 = vector.load %arg6[%c0_18, %c0_19, %c0_20] : memref<1x1x256xf32, #tpu.memory_space<vmem>>, vector<1x1x256xf32>
    tpu.vector_store %arg6[%c0_18, %c0_19, %c0_20], %89 {strides = array<i32>} : memref<1x1x256xf32, #tpu.memory_space<vmem>>, vector<1x1x256xf32>,
    return
  }
  func.func @transform_0(%arg0: i32, %arg1: i32) -> (i32, i32) {
    %c0_i32 = arith.constant 0 : i32
    %c0_i32_0 = arith.constant 0 : i32
    %c0_i32_1 = arith.constant 0 : i32
    return %c0_i32, %c0_i32_0 : i32, i32
  }
  func.func @transform_1(%arg0: i32, %arg1: i32) -> (i32, i32, i32) {
    %c0_i32 = arith.constant 0 : i32
    %c0_i32_0 = arith.constant 0 : i32
    return %arg0, %c0_i32, %arg1 : i32, i32, i32
  }
  func.func @transform_2(%arg0: i32, %arg1: i32) -> (i32, i32) {
    %c0_i32 = arith.constant 0 : i32
    %c0_i32_0 = arith.constant 0 : i32
    %c0_i32_1 = arith.constant 0 : i32
    return %c0_i32, %c0_i32_0 : i32, i32
  }
  func.func @transform_3(%arg0: i32, %arg1: i32) -> (i32, i32, i32) {
    %c0_i32 = arith.constant 0 : i32
    %c0_i32_0 = arith.constant 0 : i32
    return %arg0, %c0_i32, %arg1 : i32, i32, i32
  }
  func.func @transform_4(%arg0: i32, %arg1: i32) -> (i32, i32, i32) {
    %c0_i32 = arith.constant 0 : i32
    %c0_i32_0 = arith.constant 0 : i32
    return %arg0, %c0_i32, %arg1 : i32, i32, i32
  }
}

</mosaic_0001>

<llo_original>
// kernel: tpu_custom_call.1
$region0: #{tpu_custom_call.1}
  #allocation0 [shape = 'u32[]', space=smem, size = 0x4, offset = 0x4, fixed_abs, tag = 'smem constant byte address 0x4 - core index']
  #allocation1 [shape = 'u32[144,128]{1,0:T(1,128)}', space=vmem, size = 0x12000, scoped, tag = 'internal scratch']
  %s0 = inlined_call_operand.hbm [shape: f32[2,9], index: 0, kind: input, shape index: {}]
  %s1 = inlined_call_operand.hbm [shape: f32[2,2,256], index: 1, kind: input, shape index: {}]
  %s2 = inlined_call_operand.hbm [shape: bf16[80,128], index: 2, kind: input, shape index: {}]
  %s3 = inlined_call_operand.hbm [shape: f32[2,4,256], index: 3, kind: output, shape index: {0}]
  %s4 = inlined_call_operand.hbm [shape: f32[2,1,256], index: 4, kind: output, shape index: {1}]
  %5 = xla_tuple %s3, %s4
  %s6 = sld [smem:[#allocation0]]
  $region65: #{tpu_custom_call.1} parent=0
    _
  %s8 = ssub.s32 1, %s6
  %s9 = scalar_select 0, %s8, %s6
  $region1: #{tpu_custom_call.1} parent=0
    #allocation2 [shape = 'u8[1024]{0}', space=smem, size = 0x400, scoped, tag = 'input window, operand 0, single buffered']
    #allocation3 [shape = 's32[2]{0}', space=sflag, size = 0x8, scoped, tag = 'scoped memory for tpu_custom_call.1']
    #allocation4 [shape = 's32[2]{0}', space=sflag, size = 0x8, scoped, tag = 'scoped memory for tpu_custom_call.1']
    #allocation5 [shape = 's32[2]{0}', space=sflag, size = 0x8, scoped, tag = 'scoped memory for tpu_custom_call.1']
    #allocation6 [shape = 'u8[4096]{0}', space=vmem, size = 0x1000, scoped, tag = 'input window, operand 1']
    #allocation7 [shape = 'u8[20480]{0}', space=vmem, size = 0x5000, scoped, tag = 'input window, operand 2, single buffered']
    #allocation8 [shape = 's32[1]{0}', space=sflag, size = 0x4, scoped, tag = 'scoped memory for tpu_custom_call.1']
    #allocation9 [shape = 'u8[8192]{0}', space=vmem, size = 0x2000, scoped, tag = 'output window, operand 0']
    #allocation10 [shape = 'u8[2048]{0}', space=vmem, size = 0x800, scoped, tag = 'output window, operand 1']
    #allocation11 [shape = 's32[2]{0}', space=sflag, size = 0x8, scoped, tag = 'scoped memory for tpu_custom_call.1']
    %10 = vsyncpa [#allocation5], 0
    %11 = vsyncpa [#allocation3], 0
    %s12 = scalar_lea.sflag [#allocation3], 1
    %13 = vsyncpa %s12, 0
    %14 = vsyncpa [#allocation8], 0
    %15 = vsyncpa [#allocation4], 0
    %s16 = scalar_lea.sflag [#allocation4], 1
    %17 = vsyncpa %s16, 0
    %18 = vsyncpa [#allocation11], 0
    %s19 = scalar_lea.sflag [#allocation11], 1
    %20 = vsyncpa %s19, 0
    loop: start=0, step=1, limit=4
    $region2: #{tpu_custom_call.1} parent=1 // loop_pre_header
      _
    $region3: #{tpu_custom_call.1} parent=1 // loop_header
      %s22 = sphi 0, %s26
      %p23 = scmp.ge.s32.totalorder %s22, 4
      %s29 = sphi 0, %s41
      %s30 = sphi 0, %s37
      %s31 = sphi 0, %s29
      %s32 = sphi 0, %s30
      %s33 = sphi 0, %s31
      %s34 = sphi 0, %s32
      %s42 = sphi 0, %s42
      %s44 = sphi 0, %s42
      %s45 = sphi 0, %s44
      %s59 = sphi 0, %s45
      %s67 = sphi 0, %s69
      %s70 = sphi 0, %s67
      %s71 = sphi 0, %s70
      %s87 = sphi 0, %s71
      %s91 = sphi 0, %s91
      %s93 = sphi 0, %s91
      %s94 = sphi 0, %s93
      %s108 = sphi 0, %s94
      %s116 = sphi 0, %s118
      %s119 = sphi 0, %s116
      %s120 = sphi 0, %s119
      %s136 = sphi 0, %s120
      %s144 = sphi 0, %s146
      %s147 = sphi 0, %s144
      %s148 = sphi 0, %s147
      %s164 = sphi 0, %s148
    $region4: #{tpu_custom_call.1} parent=1 // loop_header_branch
      %25 = sbr.rel (%p23) target = $region8
    $region5: #{tpu_custom_call.1} parent=1 // loop_body
      %s27 = ssub.s32 %s22, 1
      %s28 = ssub.s32 %s22, 2
      %s35 = sadd.s32 1, %s30
      %p36 = scmp.ge.s32.totalorder %s35, 1
      %s37 = scalar_select %p36, 0, %s35
      %s38 = sadd.s32 1, %s29
      %s39 = scalar_select %p36, %s38, %s29
      %p40 = scmp.ge.s32.totalorder %s39, 2
      %s41 = scalar_select %p40, 0, %s39
      %s43 = sadd.s32 %s42, 1
      %p46 = scmp.eq.s32.totalorder %s22, 1
      %p47 = scmp.ne.s32.totalorder %s42, %s44
      %p48 = scmp.eq.s32.totalorder %s22, 0
      %p49 = por %p47, %p48
      %p50 = scmp.ne.s32.totalorder %s42, %s44
      %p51 = scmp.eq.s32.totalorder %s27, 1
      %p52 = por %p50, %p51
      %p53 = scmp.ne.s32.totalorder %s44, %s45
      %p54 = scmp.eq.s32.totalorder %s27, 0
      %p55 = por %p53, %p54
      %p56 = scmp.ne.s32.totalorder %s44, %s45
      %p57 = scmp.eq.s32.totalorder %s28, 1
      %p58 = por %p56, %p57
      %p60 = scmp.ne.s32.totalorder %s45, %s59
      %p61 = scmp.eq.s32.totalorder %s28, 0
      %p62 = por %p60, %p61
      %s63 = ssub.s32 %s29, %s41
      %s64 = ssub.s32 %s30, %s37
      %s65 = sor.u32 %s63, %s64
      %p66 = scmp.eq.s32.totalorder %s65, 0
      %s68 = sadd.s32 %s67, 1
      %s69 = scalar_select %p66, %s67, %s68
      %p72 = pneg %p66
      %p73 = scmp.eq.s32.totalorder %s22, 1
      %p74 = por %p72, %p73
      %p75 = scmp.ne.s32.totalorder %s67, %s70
      %p76 = scmp.eq.s32.totalorder %s22, 0
      %p77 = por %p75, %p76
      %p78 = scmp.ne.s32.totalorder %s67, %s70
      %p79 = scmp.eq.s32.totalorder %s27, 1
      %p80 = por %p78, %p79
      %p81 = scmp.ne.s32.totalorder %s70, %s71
      %p82 = scmp.eq.s32.totalorder %s27, 0
      %p83 = por %p81, %p82
      %p84 = scmp.ne.s32.totalorder %s70, %s71
      %p85 = scmp.eq.s32.totalorder %s28, 1
      %p86 = por %p84, %p85
      %p88 = scmp.ne.s32.totalorder %s71, %s87
      %p89 = scmp.eq.s32.totalorder %s28, 0
      %p90 = por %p88, %p89
      %s92 = sadd.s32 %s91, 1
      %p95 = scmp.eq.s32.totalorder %s22, 1
      %p96 = scmp.ne.s32.totalorder %s91, %s93
      %p97 = scmp.eq.s32.totalorder %s22, 0
      %p98 = por %p96, %p97
      %p99 = scmp.ne.s32.totalorder %s91, %s93
      %p100 = scmp.eq.s32.totalorder %s27, 1
      %p101 = por %p99, %p100
      %p102 = scmp.ne.s32.totalorder %s93, %s94
      %p103 = scmp.eq.s32.totalorder %s27, 0
      %p104 = por %p102, %p103
      %p105 = scmp.ne.s32.totalorder %s93, %s94
      %p106 = scmp.eq.s32.totalorder %s28, 1
      %p107 = por %p105, %p106
      %p109 = scmp.ne.s32.totalorder %s94, %s108
      %p110 = scmp.eq.s32.totalorder %s28, 0
      %p111 = por %p109, %p110
      %s112 = ssub.s32 %s29, %s41
      %s113 = ssub.s32 %s30, %s37
      %s114 = sor.u32 %s112, %s113
      %p115 = scmp.eq.s32.totalorder %s114, 0
      %s117 = sadd.s32 %s116, 1
      %s118 = scalar_select %p115, %s116, %s117
      %p121 = pneg %p115
      %p122 = scmp.eq.s32.totalorder %s22, 1
      %p123 = por %p121, %p122
      %p124 = scmp.ne.s32.totalorder %s116, %s119
      %p125 = scmp.eq.s32.totalorder %s22, 0
      %p126 = por %p124, %p125
      %p127 = scmp.ne.s32.totalorder %s116, %s119
      %p128 = scmp.eq.s32.totalorder %s27, 1
      %p129 = por %p127, %p128
      %p130 = scmp.ne.s32.totalorder %s119, %s120
      %p131 = scmp.eq.s32.totalorder %s27, 0
      %p132 = por %p130, %p131
      %p133 = scmp.ne.s32.totalorder %s119, %s120
      %p134 = scmp.eq.s32.totalorder %s28, 1
      %p135 = por %p133, %p134
      %p137 = scmp.ne.s32.totalorder %s120, %s136
      %p138 = scmp.eq.s32.totalorder %s28, 0
      %p139 = por %p137, %p138
      %s140 = ssub.s32 %s29, %s41
      %s141 = ssub.s32 %s30, %s37
      %s142 = sor.u32 %s140, %s141
      %p143 = scmp.eq.s32.totalorder %s142, 0
      %s145 = sadd.s32 %s144, 1
      %s146 = scalar_select %p143, %s144, %s145
      %p149 = pneg %p143
      %p150 = scmp.eq.s32.totalorder %s22, 1
      %p151 = por %p149, %p150
      %p152 = scmp.ne.s32.totalorder %s144, %s147
      %p153 = scmp.eq.s32.totalorder %s22, 0
      %p154 = por %p152, %p153
      %p155 = scmp.ne.s32.totalorder %s144, %s147
      %p156 = scmp.eq.s32.totalorder %s27, 1
      %p157 = por %p155, %p156
      %p158 = scmp.ne.s32.totalorder %s147, %s148
      %p159 = scmp.eq.s32.totalorder %s27, 0
      %p160 = por %p158, %p159
      %p161 = scmp.ne.s32.totalorder %s147, %s148
      %p162 = scmp.eq.s32.totalorder %s28, 1
      %p163 = por %p161, %p162
      %p165 = scmp.ne.s32.totalorder %s148, %s164
      %p166 = scmp.eq.s32.totalorder %s28, 0
      %p167 = por %p165, %p166
      %p168 = scmp.le.s32.totalorder 1, %s22
      %p169 = scmp.lt.s32.totalorder %s22, 3
      %p170 = pnand %p168, %p169
      %p171 = pneg %p170
      // Predicated region
      $region9: #{tpu_custom_call.1} parent=5 // pred_check
        _
      $region10: #{tpu_custom_call.1} parent=5 // pred_check_branch
        %173 = sbr.rel (%p170) target = $region12
      $region11: #{tpu_custom_call.1} parent=5 // pred_region
        %s174 = ssub.s32 %s22, 1
        // Predicated region
        $region13: #{tpu_custom_call.1} parent=11 // pred_check
          %p175 = pneg %p55
        $region14: #{tpu_custom_call.1} parent=11 // pred_check_branch
          %177 = sbr.rel (%p175) target = $region16
        $region15: #{tpu_custom_call.1} parent=11 // pred_region
          %s179 = ssub.s32 32, 32
          %180 = vsyncadd [#allocation5], %s179
          %183 = dma.hbm_to_smem %s0, 32, [#allocation2], [#allocation5]
        $region16: #{tpu_custom_call.1} parent=11 // pred_fallthru
          _
        // Predicated region
        $region17: #{tpu_custom_call.1} parent=11 // pred_check
          %p184 = pneg %p104
        $region18: #{tpu_custom_call.1} parent=11 // pred_check_branch
          %186 = sbr.rel (%p184) target = $region20
        $region19: #{tpu_custom_call.1} parent=11 // pred_region
          %s188 = ssub.s32 640, 640
          %189 = vsyncadd [#allocation8], %s188
          %s190 = sshll.u32 [#allocation7], 4
          %s191 = int_to_ptr.vmem [resolvable:$true] %s190
          %196 = dma.hbm_to_vmem [thread:$0]  %s2, 640, %s191, [#allocation8], 64, 64, 4
        $region20: #{tpu_custom_call.1} parent=11 // pred_fallthru
          _
      $region12: #{tpu_custom_call.1} parent=5 // pred_fallthru
        _
      %p197 = scmp.lt.s32.totalorder %s22, 2
      // Predicated region
      $region21: #{tpu_custom_call.1} parent=5 // pred_check
        %p198 = pneg %p197
      $region22: #{tpu_custom_call.1} parent=5 // pred_check_branch
        %200 = sbr.rel (%p198) target = $region24
      $region23: #{tpu_custom_call.1} parent=5 // pred_region
        // Predicated region
        $region25: #{tpu_custom_call.1} parent=23 // pred_check
          %p201 = pneg %p77
        $region26: #{tpu_custom_call.1} parent=23 // pred_check_branch
          %203 = sbr.rel (%p201) target = $region28
        $region27: #{tpu_custom_call.1} parent=23 // pred_region
          %s204 = sand.u32 %s67, 1
          %s205 = scalar_lea.sflag [#allocation3], %s204
          %s206 = sand.u32 %s67, 1
          %s207 = smul.addr %s206, 4
          %s208 = scalar_lea.vmem [#allocation6], %s207
          %s209 = smul.u32 2, %s30
          %s211 = ssub.s32 64, 64
          %212 = vsyncadd %s205, %s211
          %s213 = smul.addr %s29, 2
          %s214 = sadd.s32 %s209, %s213
          %s215 = smul.addr %s214, 32
          %s216 = scalar_lea.hbm %s1, %s215
          %s218 = sshll.u32 %s208, 4
          %s219 = int_to_ptr.vmem [resolvable:$true] %s218
          %221 = dma.hbm_to_vmem [thread:$0]  %s216, 64, %s219, %s205
        $region28: #{tpu_custom_call.1} parent=23 // pred_fallthru
          _
      $region24: #{tpu_custom_call.1} parent=5 // pred_fallthru
        _
      %p222 = scmp.le.s32.totalorder 1, %s22
      %p223 = scmp.lt.s32.totalorder %s22, 3
      %p224 = pnand %p222, %p223
      %p225 = pneg %p224
      // Predicated region
      $region29: #{tpu_custom_call.1} parent=5 // pred_check
        _
      $region30: #{tpu_custom_call.1} parent=5 // pred_check_branch
        %227 = sbr.rel (%p224) target = $region32
      $region31: #{tpu_custom_call.1} parent=5 // pred_region
        %s228 = ssub.s32 %s22, 1
        // Predicated region
        $region33: #{tpu_custom_call.1} parent=31 // pred_check
          %p229 = pneg %p55
        $region34: #{tpu_custom_call.1} parent=31 // pred_check_branch
          %231 = sbr.rel (%p229) target = $region36
        $region35: #{tpu_custom_call.1} parent=31 // pred_region
          %232 = dma.done [#allocation5], 32
        $region36: #{tpu_custom_call.1} parent=31 // pred_fallthru
          _
        %s233 = sand.u32 %s70, 1
        %s234 = scalar_lea.sflag [#allocation3], %s233
        %s235 = sand.u32 %s70, 1
        %s236 = smul.addr %s235, 4
        %s237 = scalar_lea.vmem [#allocation6], %s236
        // Predicated region
        $region37: #{tpu_custom_call.1} parent=31 // pred_check
          %p238 = pneg %p83
        $region38: #{tpu_custom_call.1} parent=31 // pred_check_branch
          %240 = sbr.rel (%p238) target = $region40
        $region39: #{tpu_custom_call.1} parent=31 // pred_region
          %241 = dma.done %s234, 64
        $region40: #{tpu_custom_call.1} parent=31 // pred_fallthru
          _
        // Predicated region
        $region41: #{tpu_custom_call.1} parent=31 // pred_check
          %p242 = pneg %p104
        $region42: #{tpu_custom_call.1} parent=31 // pred_check_branch
          %244 = sbr.rel (%p242) target = $region44
        $region43: #{tpu_custom_call.1} parent=31 // pred_region
          %245 = dma.done [#allocation8], 640
        $region44: #{tpu_custom_call.1} parent=31 // pred_fallthru
          _
        %246 = sfence
        %p247 = pneg %p55
        %p248 = pneg %p52
        %s249 = sand.u32 %s70, 1
        %s250 = scalar_lea.sflag [#allocation3], %s249
        %s251 = sand.u32 %s70, 1
        %s252 = smul.addr %s251, 4
        %s253 = scalar_lea.vmem [#allocation6], %s252
        %p254 = pneg %p83
        %p255 = pneg %p80
        %p256 = pneg %p104
        %p257 = pneg %p101
        %p258 = pneg %p132
        %p259 = pneg %p129
        %s260 = sand.u32 %s119, 1
        %s261 = scalar_lea.sflag [#allocation4], %s260
        %s262 = sand.u32 %s119, 1
        %s263 = smul.addr %s262, 8
        %s264 = scalar_lea.vmem [#allocation9], %s263
        %p265 = pneg %p160
        %p266 = pneg %p157
        %s267 = sand.u32 %s147, 1
        %s268 = scalar_lea.sflag [#allocation11], %s267
        %s269 = sand.u32 %s147, 1
        %s270 = smul.addr %s269, 2
        %s271 = scalar_lea.vmem [#allocation10], %s270
        %s272 = smul.u32 2, %s32
        %s273 = smul.u32 2, %s32
        %s274 = smul.u32 2, %s32
        %v276 = vld [vmem:[%s237] sm:$0xf]
        %s277 = smul.u32 %s31, 128
        %s278 = sld [smem:[#allocation2 + %s277]]
        %v279 = vstv %s278
        %v280 = vmul.f32 %v279, %v276
        %s281 = sadd.s32 %s277, 1
        %s282 = sld [smem:[#allocation2 + %s281]]
        %v283 = vstv %s282
        %v284 = vmul.f32 %v283, %v276
        %v286 = vrot.slane %v284, 7
        %v287 = vrot.slane %v286, 2
        %v289 = vadd.f32 %v280, %v287
        %s290 = sadd.s32 %s277, 2
        %s291 = sld [smem:[#allocation2 + %s290]]
        %v292 = vstv %s291
        %v293 = vadd.f32 %v289, %v292
        %s294 = sadd.s32 %s277, 3
        %s295 = sld [smem:[#allocation2 + %s294]]
        %v296 = vstv %s295
        %v297 = vmul.f32 %v296, %v276
        %s298 = sadd.s32 %s277, 4
        %s299 = sld [smem:[#allocation2 + %s298]]
        %v300 = vstv %s299
        %v301 = vmul.f32 %v300, %v276
        %v303 = vrot.slane %v301, 7
        %v304 = vrot.slane %v303, 2
        %v306 = vadd.f32 %v297, %v304
        %s307 = sadd.s32 %s277, 5
        %s308 = sld [smem:[#allocation2 + %s307]]
        %v309 = vstv %s308
        %v310 = vadd.f32 %v306, %v309
        %s311 = sadd.s32 %s277, 6
        %s312 = sld [smem:[#allocation2 + %s311]]
        %v313 = vstv %s312
        %v314 = vmul.f32 %v313, %v276
        %s315 = sadd.s32 %s277, 7
        %s316 = sld [smem:[#allocation2 + %s315]]
        %v317 = vstv %s316
        %v318 = vmul.f32 %v317, %v276
        %v320 = vrot.slane %v318, 7
        %v321 = vrot.slane %v320, 2
        %v323 = vadd.f32 %v314, %v321
        %s324 = sadd.s32 %s277, 8
        %s325 = sld [smem:[#allocation2 + %s324]]
        %v326 = vstv %s325
        %v327 = vadd.f32 %v323, %v326
        %v328 = vand.u32 2147483647, %v327
        %vm329 = vcmp.lt.f32.partialorder %v328, 1e-06
        %v330 = vsel %vm329, 1.0, %v327
        %v331 = vrcp.pop %v330
        %v332 = vmul.f32 %v330, %v331
        %v333 = vsub.f32 2.0, %v332
        %v334 = vmul.f32 %v331, %v333
        %v335 = vmul.f32 %v293, %v334
        %v336 = vsel %vm329, -1000000.0, %v335
        %v337 = vmul.f32 %v310, %v334
        %v338 = vsel %vm329, -1000000.0, %v337
        %v339 = vlaneseq
        %v340 = vshrl.u32 %v339, 7
        %v341 = vadd.s32 %v340, 8
        %v342 = vadd.s32 %v340, 16
        %v343 = vadd.s32 %v340, 24
        %v344 = vadd.s32 %v340, 32
        %v345 = vadd.s32 %v340, 40
        %v346 = vadd.s32 %v340, 48
        %v347 = vadd.s32 %v340, 56
        %v348 = vadd.s32 %v340, 64
        %v349 = vadd.s32 %v340, 72
        %v350 = vadd.s32 %v340, 80
        %v351 = vadd.s32 %v340, 88
        %v352 = vadd.s32 %v340, 96
        %v353 = vadd.s32 %v340, 104
        %v354 = vadd.s32 %v340, 112
        %v355 = vadd.s32 %v340, 120
        %v356 = vcvt.s32.f32 %v340
        %v357 = vcvt.s32.f32 %v341
        %v358 = vcvt.s32.f32 %v342
        %v359 = vcvt.s32.f32 %v343
        %v360 = vcvt.s32.f32 %v344
        %v361 = vcvt.s32.f32 %v345
        %v362 = vcvt.s32.f32 %v346
        %v363 = vcvt.s32.f32 %v347
        %v364 = vcvt.s32.f32 %v348
        %v365 = vcvt.s32.f32 %v349
        %v366 = vcvt.s32.f32 %v350
        %v367 = vcvt.s32.f32 %v351
        %v368 = vcvt.s32.f32 %v352
        %v369 = vcvt.s32.f32 %v353
        %v370 = vcvt.s32.f32 %v354
        %v371 = vcvt.s32.f32 %v355
        %v373 = vlaneseq
        %v374 = vshrl.u32 %v373, 7
        %v375 = vsub.s32 0, %v374
        %v376 = vrot.slane %v336, %v375
        %v377 = vlaneseq
        %v378 = vshrl.u32 %v377, 7
        %v379 = vsub.s32 2, %v378
        %v380 = vrot.slane %v336, %v379
        %v383 = vlaneseq
        %v384 = vshrl.u32 %v383, 7
        %v385 = vsub.s32 0, %v384
        %v386 = vrot.slane %v376, %v385
        %v387 = vlaneseq
        %v388 = vshrl.u32 %v387, 7
        %v389 = vsub.s32 0, %v388
        %v390 = vrot.slane %v380, %v389
        %v391 = vsub.f32 %v386, %v356
        %v392 = vsub.f32 %v390, %v356
        %v393 = vsub.f32 %v386, %v357
        %v394 = vsub.f32 %v390, %v357
        %v395 = vsub.f32 %v386, %v358
        %v396 = vsub.f32 %v390, %v358
        %v397 = vsub.f32 %v386, %v359
        %v398 = vsub.f32 %v390, %v359
        %v399 = vsub.f32 %v386, %v360
        %v400 = vsub.f32 %v390, %v360
        %v401 = vsub.f32 %v386, %v361
        %v402 = vsub.f32 %v390, %v361
        %v403 = vsub.f32 %v386, %v362
        %v404 = vsub.f32 %v390, %v362
        %v405 = vsub.f32 %v386, %v363
        %v406 = vsub.f32 %v390, %v363
        %v407 = vsub.f32 %v386, %v364
        %v408 = vsub.f32 %v390, %v364
        %v409 = vsub.f32 %v386, %v365
        %v410 = vsub.f32 %v390, %v365
        %v411 = vsub.f32 %v386, %v366
        %v412 = vsub.f32 %v390, %v366
        %v413 = vsub.f32 %v386, %v367
        %v414 = vsub.f32 %v390, %v367
        %v415 = vsub.f32 %v386, %v368
        %v416 = vsub.f32 %v390, %v368
        %v417 = vsub.f32 %v386, %v369
        %v418 = vsub.f32 %v390, %v369
        %v419 = vsub.f32 %v386, %v370
        %v420 = vsub.f32 %v390, %v370
        %v421 = vsub.f32 %v386, %v371
        %v422 = vsub.f32 %v390, %v371
        %v423 = vand.u32 2147483647, %v391
        %v424 = vand.u32 2147483647, %v392
        %v425 = vand.u32 2147483647, %v393
        %v426 = vand.u32 2147483647, %v394
        %v427 = vand.u32 2147483647, %v395
        %v428 = vand.u32 2147483647, %v396
        %v429 = vand.u32 2147483647, %v397
        %v430 = vand.u32 2147483647, %v398
        %v431 = vand.u32 2147483647, %v399
        %v432 = vand.u32 2147483647, %v400
        %v433 = vand.u32 2147483647, %v401
        %v434 = vand.u32 2147483647, %v402
        %v435 = vand.u32 2147483647, %v403
        %v436 = vand.u32 2147483647, %v404
        %v437 = vand.u32 2147483647, %v405
        %v438 = vand.u32 2147483647, %v406
        %v439 = vand.u32 2147483647, %v407
        %v440 = vand.u32 2147483647, %v408
        %v441 = vand.u32 2147483647, %v409
        %v442 = vand.u32 2147483647, %v410
        %v443 = vand.u32 2147483647, %v411
        %v444 = vand.u32 2147483647, %v412
        %v445 = vand.u32 2147483647, %v413
        %v446 = vand.u32 2147483647, %v414
        %v447 = vand.u32 2147483647, %v415
        %v448 = vand.u32 2147483647, %v416
        %v449 = vand.u32 2147483647, %v417
        %v450 = vand.u32 2147483647, %v418
        %v451 = vand.u32 2147483647, %v419
        %v452 = vand.u32 2147483647, %v420
        %v453 = vand.u32 2147483647, %v421
        %v454 = vand.u32 2147483647, %v422
        %v455 = vsub.f32 1.0, %v423
        %v456 = vsub.f32 1.0, %v424
        %v457 = vsub.f32 1.0, %v425
        %v458 = vsub.f32 1.0, %v426
        %v459 = vsub.f32 1.0, %v427
        %v460 = vsub.f32 1.0, %v428
        %v461 = vsub.f32 1.0, %v429
        %v462 = vsub.f32 1.0, %v430
        %v463 = vsub.f32 1.0, %v431
        %v464 = vsub.f32 1.0, %v432
        %v465 = vsub.f32 1.0, %v433
        %v466 = vsub.f32 1.0, %v434
        %v467 = vsub.f32 1.0, %v435
        %v468 = vsub.f32 1.0, %v436
        %v469 = vsub.f32 1.0, %v437
        %v470 = vsub.f32 1.0, %v438
        %v471 = vsub.f32 1.0, %v439
        %v472 = vsub.f32 1.0, %v440
        %v473 = vsub.f32 1.0, %v441
        %v474 = vsub.f32 1.0, %v442
        %v475 = vsub.f32 1.0, %v443
        %v476 = vsub.f32 1.0, %v444
        %v477 = vsub.f32 1.0, %v445
        %v478 = vsub.f32 1.0, %v446
        %v479 = vsub.f32 1.0, %v447
        %v480 = vsub.f32 1.0, %v448
        %v481 = vsub.f32 1.0, %v449
        %v482 = vsub.f32 1.0, %v450
        %v483 = vsub.f32 1.0, %v451
        %v484 = vsub.f32 1.0, %v452
        %v485 = vsub.f32 1.0, %v453
        %v486 = vsub.f32 1.0, %v454
        %v487 = vmax.f32 %v455, 0.0
        %v488 = vmax.f32 %v456, 0.0
        %v489 = vmax.f32 %v457, 0.0
        %v490 = vmax.f32 %v458, 0.0
        %v491 = vmax.f32 %v459, 0.0
        %v492 = vmax.f32 %v460, 0.0
        %v493 = vmax.f32 %v461, 0.0
        %v494 = vmax.f32 %v462, 0.0
        %v495 = vmax.f32 %v463, 0.0
        %v496 = vmax.f32 %v464, 0.0
        %v497 = vmax.f32 %v465, 0.0
        %v498 = vmax.f32 %v466, 0.0
        %v499 = vmax.f32 %v467, 0.0
        %v500 = vmax.f32 %v468, 0.0
        %v501 = vmax.f32 %v469, 0.0
        %v502 = vmax.f32 %v470, 0.0
        %v503 = vmax.f32 %v471, 0.0
        %v504 = vmax.f32 %v472, 0.0
        %v505 = vmax.f32 %v473, 0.0
        %v506 = vmax.f32 %v474, 0.0
        %v507 = vmax.f32 %v475, 0.0
        %v508 = vmax.f32 %v476, 0.0
        %v509 = vmax.f32 %v477, 0.0
        %v510 = vmax.f32 %v478, 0.0
        %v511 = vmax.f32 %v479, 0.0
        %v512 = vmax.f32 %v480, 0.0
        %v513 = vmax.f32 %v481, 0.0
        %v514 = vmax.f32 %v482, 0.0
        %v515 = vmax.f32 %v483, 0.0
        %v516 = vmax.f32 %v484, 0.0
        %v517 = vmax.f32 %v485, 0.0
        %v518 = vmax.f32 %v486, 0.0
        %v520 = vlaneseq
        %v521 = vshrl.u32 %v520, 7
        %v522 = vsub.s32 0, %v521
        %v523 = vrot.slane %v338, %v522
        %v524 = vlaneseq
        %v525 = vshrl.u32 %v524, 7
        %v526 = vsub.s32 2, %v525
        %v527 = vrot.slane %v338, %v526
        %v530 = vlaneseq
        %v531 = vshrl.u32 %v530, 7
        %v532 = vsub.s32 0, %v531
        %v533 = vrot.slane %v523, %v532
        %v534 = vlaneseq
        %v535 = vshrl.u32 %v534, 7
        %v536 = vsub.s32 0, %v535
        %v537 = vrot.slane %v527, %v536
        %v538 = vsub.f32 %v533, %v356
        %v539 = vsub.f32 %v537, %v356
        %v540 = vsub.f32 %v533, %v357
        %v541 = vsub.f32 %v537, %v357
        %v542 = vand.u32 2147483647, %v538
        %v543 = vand.u32 2147483647, %v539
        %v544 = vand.u32 2147483647, %v540
        %v545 = vand.u32 2147483647, %v541
        %v546 = vsub.f32 1.0, %v542
        %v547 = vsub.f32 1.0, %v543
        %v548 = vsub.f32 1.0, %v544
        %v549 = vsub.f32 1.0, %v545
        %v550 = vmax.f32 %v546, 0.0
        %v551 = vmax.f32 %v547, 0.0
        %v552 = vmax.f32 %v548, 0.0
        %v553 = vmax.f32 %v549, 0.0
        %v554 = vld [vmem:[#allocation7] sm:$0xf]
        %v555 = vld [vmem:[#allocation7 + $0x4] sm:$0xf]
        %v556 = vld [vmem:[#allocation7 + $0x8] sm:$0xf]
        %v557 = vld [vmem:[#allocation7 + $0xc] sm:$0xf]
        %v558 = vld [vmem:[#allocation7 + $0x10] sm:$0xf]
        %v559 = vld [vmem:[#allocation7 + $0x14] sm:$0xf]
        %v560 = vld [vmem:[#allocation7 + $0x18] sm:$0xf]
        %v561 = vld [vmem:[#allocation7 + $0x1c] sm:$0xf]
        %v562 = vld [vmem:[#allocation7 + $0x20] sm:$0xf]
        %v563 = vld [vmem:[#allocation7 + $0x24] sm:$0xf]
        %v564 = vpack.c.bf16 %v489, %v487
        %v565 = vpack.c.bf16 %v490, %v488
        %v566 = vpack.c.bf16 %v493, %v491
        %v567 = vpack.c.bf16 %v494, %v492
        %v568 = vpack.c.bf16 %v497, %v495
        %v569 = vpack.c.bf16 %v498, %v496
        %v570 = vpack.c.bf16 %v501, %v499
        %v571 = vpack.c.bf16 %v502, %v500
        %v572 = vpack.c.bf16 %v505, %v503
        %v573 = vpack.c.bf16 %v506, %v504
        %v574 = vpack.c.bf16 %v509, %v507
        %v575 = vpack.c.bf16 %v510, %v508
        %v576 = vpack.c.bf16 %v513, %v511
        %v577 = vpack.c.bf16 %v514, %v512
        %v578 = vpack.c.bf16 %v517, %v515
        %v579 = vpack.c.bf16 %v518, %v516
        %v590 = vunpack.c.l.b16 %v554
        %v591 = vunpack.c.l.b16 %v555
        %v592 = vunpack.c.l.b16 %v556
        %v593 = vunpack.c.l.b16 %v557
        %v594 = vunpack.c.l.b16 %v558
        %v595 = vunpack.c.l.b16 %v559
        %v596 = vunpack.c.l.b16 %v560
        %v597 = vunpack.c.l.b16 %v561
        %v598 = vunpack.c.l.b16 %v562
        %v599 = vunpack.c.l.b16 %v563
        %v600 = vpack.c.b16 %v591, %v590
        %v601 = vpack.c.b16 %v593, %v592
        %v602 = vpack.c.b16 %v595, %v594
        %v603 = vpack.c.b16 %v597, %v596
        %v604 = vpack.c.b16 %v599, %v598
        %610 = vmatprep.subr.bf16.mxu0 %v579
        %611 = vmatpush1.bf16.msra.mxu0 %v578
        %612 = vmatprep.subr.bf16.mxu0 %v577
        %613 = vmatpush1.bf16.msra.mxu0 %v576
        %614 = vmatprep.subr.bf16.mxu0 %v575
        %615 = vmatpush1.bf16.msra.mxu0 %v574
        %616 = vmatprep.subr.bf16.mxu0 %v573
        %617 = vmatpush1.bf16.msra.mxu0 %v572
        %618 = vmatprep.subr.bf16.mxu0 %v571
        %619 = vmatpush1.bf16.msra.mxu0 %v570
        %620 = vmatprep.subr.bf16.mxu0 %v569
        %621 = vmatpush1.bf16.msra.mxu0 %v568
        %622 = vmatprep.subr.bf16.mxu0 %v567
        %623 = vmatpush1.bf16.msra.mxu0 %v566
        %624 = vmatprep.subr.bf16.mxu0 %v565
        %625 = vmatpush1.bf16.msra.mxu0 %v564
        %626 = vmatprep.subr.bf16.mxu0 0
        %627 = vmatpush2.bf16.msra.mxu0 0
        %628 = vmatprep.subr.bf16.mxu0 0
        %629 = vmatpush2.bf16.msra.mxu0 0
        %630 = vmatprep.subr.bf16.mxu0 0
        %631 = vmatpush2.bf16.msra.mxu0 0
        %632 = vmatprep.subr.bf16.mxu0 0
        %633 = vmatpush2.bf16.msra.mxu0 0
        %634 = vmatprep.subr.bf16.mxu0 0
        %635 = vmatpush2.bf16.msra.mxu0 0
        %636 = vmatprep.subr.bf16.mxu0 0
        %637 = vmatpush2.bf16.msra.mxu0 0
        %638 = vmatprep.subr.bf16.mxu0 0
        %639 = vmatpush2.bf16.msra.mxu0 0
        %640 = vmatprep.subr.bf16.mxu0 0
        %641 = vmatpush2.bf16.msra.mxu0 0
        %642 = vmatprep.mubr.bf16.mxu0 0
        %643 = vmatmul.mubr.bf16.gmra.mxu0 %v600
        %v644 = vpop.f32.mrf.mxu0
        %v645 = vadd.f32 0.0, %v644
        %v646 = vpop.f32.mrf.mxu0
        %v647 = vadd.f32 0.0, %v646
        %v648 = vpop.f32.mrf.mxu0
        %v649 = vadd.f32 0.0, %v648
        %v650 = vpop.f32.mrf.mxu0
        %v651 = vadd.f32 0.0, %v650
        %652 = vmatprep.mubr.bf16.mxu0 0
        %653 = vmatmul.mubr.bf16.gmra.mxu0 %v601
        %v654 = vpop.f32.mrf.mxu0
        %v655 = vadd.f32 0.0, %v654
        %v656 = vpop.f32.mrf.mxu0
        %v657 = vadd.f32 0.0, %v656
        %v658 = vpop.f32.mrf.mxu0
        %v659 = vadd.f32 0.0, %v658
        %v660 = vpop.f32.mrf.mxu0
        %v661 = vadd.f32 0.0, %v660
        %662 = vmatprep.mubr.bf16.mxu0 0
        %663 = vmatmul.mubr.bf16.gmra.mxu0 %v602
        %v664 = vpop.f32.mrf.mxu0
        %v665 = vadd.f32 0.0, %v664
        %v666 = vpop.f32.mrf.mxu0
        %v667 = vadd.f32 0.0, %v666
        %v668 = vpop.f32.mrf.mxu0
        %v669 = vadd.f32 0.0, %v668
        %v670 = vpop.f32.mrf.mxu0
        %v671 = vadd.f32 0.0, %v670
        %672 = vmatprep.mubr.bf16.mxu0 0
        %673 = vmatmul.mubr.bf16.gmra.mxu0 %v603
        %v674 = vpop.f32.mrf.mxu0
        %v675 = vadd.f32 0.0, %v674
        %v676 = vpop.f32.mrf.mxu0
        %v677 = vadd.f32 0.0, %v676
        %v678 = vpop.f32.mrf.mxu0
        %v679 = vadd.f32 0.0, %v678
        %v680 = vpop.f32.mrf.mxu0
        %v681 = vadd.f32 0.0, %v680
        %682 = vmatprep.mubr.bf16.mxu0 0
        %683 = vmatmul.mubr.bf16.gmra.mxu0 %v604
        %v684 = vpop.f32.mrf.mxu0
        %v685 = vadd.f32 0.0, %v684
        %v686 = vpop.f32.mrf.mxu0
        %v687 = vadd.f32 0.0, %v686
        %v688 = vpop.f32.mrf.mxu0
        %v689 = vadd.f32 0.0, %v688
        %v690 = vpop.f32.mrf.mxu0
        %v691 = vadd.f32 0.0, %v690
        %692 = vdwg.mxu0
        %v693 = vmul.f32 %v645, %v550
        %v694 = vmul.f32 %v647, %v551
        %v695 = vmul.f32 %v649, %v552
        %v696 = vmul.f32 %v651, %v553
        %v697 = vmul.f32 %v655, %v550
        %v698 = vmul.f32 %v657, %v551
        %v699 = vmul.f32 %v659, %v552
        %v700 = vmul.f32 %v661, %v553
        %v701 = vmul.f32 %v665, %v550
        %v702 = vmul.f32 %v667, %v551
        %v703 = vmul.f32 %v669, %v552
        %v704 = vmul.f32 %v671, %v553
        %v705 = vmul.f32 %v675, %v550
        %v706 = vmul.f32 %v677, %v551
        %v707 = vmul.f32 %v679, %v552
        %v708 = vmul.f32 %v681, %v553
        %v709 = vmul.f32 %v685, %v550
        %v710 = vmul.f32 %v687, %v551
        %v711 = vmul.f32 %v689, %v552
        %v712 = vmul.f32 %v691, %v553
        %v713 = vadd.f32 %v693, %v695
        %v714 = vrot.slane %v713, 4
        %v715 = vadd.f32 %v713, %v714
        %v716 = vrot.slane %v715, 2
        %v717 = vadd.f32 %v715, %v716
        %v718 = vrot.slane %v717, 1
        %v719 = vadd.f32 %v717, %v718
        %v720 = vadd.f32 %v694, %v696
        %v721 = vrot.slane %v720, 4
        %v722 = vadd.f32 %v720, %v721
        %v723 = vrot.slane %v722, 2
        %v724 = vadd.f32 %v722, %v723
        %v725 = vrot.slane %v724, 1
        %v726 = vadd.f32 %v724, %v725
        %v727 = vadd.f32 %v697, %v699
        %v728 = vrot.slane %v727, 4
        %v729 = vadd.f32 %v727, %v728
        %v730 = vrot.slane %v729, 2
        %v731 = vadd.f32 %v729, %v730
        %v732 = vrot.slane %v731, 1
        %v733 = vadd.f32 %v731, %v732
        %v734 = vadd.f32 %v698, %v700
        %v735 = vrot.slane %v734, 4
        %v736 = vadd.f32 %v734, %v735
        %v737 = vrot.slane %v736, 2
        %v738 = vadd.f32 %v736, %v737
        %v739 = vrot.slane %v738, 1
        %v740 = vadd.f32 %v738, %v739
        %v741 = vadd.f32 %v701, %v703
        %v742 = vrot.slane %v741, 4
        %v743 = vadd.f32 %v741, %v742
        %v744 = vrot.slane %v743, 2
        %v745 = vadd.f32 %v743, %v744
        %v746 = vrot.slane %v745, 1
        %v747 = vadd.f32 %v745, %v746
        %v748 = vadd.f32 %v702, %v704
        %v749 = vrot.slane %v748, 4
        %v750 = vadd.f32 %v748, %v749
        %v751 = vrot.slane %v750, 2
        %v752 = vadd.f32 %v750, %v751
        %v753 = vrot.slane %v752, 1
        %v754 = vadd.f32 %v752, %v753
        %v755 = vadd.f32 %v705, %v707
        %v756 = vrot.slane %v755, 4
        %v757 = vadd.f32 %v755, %v756
        %v758 = vrot.slane %v757, 2
        %v759 = vadd.f32 %v757, %v758
        %v760 = vrot.slane %v759, 1
        %v761 = vadd.f32 %v759, %v760
        %v762 = vadd.f32 %v706, %v708
        %v763 = vrot.slane %v762, 4
        %v764 = vadd.f32 %v762, %v763
        %v765 = vrot.slane %v764, 2
        %v766 = vadd.f32 %v764, %v765
        %v767 = vrot.slane %v766, 1
        %v768 = vadd.f32 %v766, %v767
        %v769 = vadd.f32 %v709, %v711
        %v770 = vrot.slane %v769, 4
        %v771 = vadd.f32 %v769, %v770
        %v772 = vrot.slane %v771, 2
        %v773 = vadd.f32 %v771, %v772
        %v774 = vrot.slane %v773, 1
        %v775 = vadd.f32 %v773, %v774
        %v776 = vadd.f32 %v710, %v712
        %v777 = vrot.slane %v776, 4
        %v778 = vadd.f32 %v776, %v777
        %v779 = vrot.slane %v778, 2
        %v780 = vadd.f32 %v778, %v779
        %v781 = vrot.slane %v780, 1
        %v782 = vadd.f32 %v780, %v781
        %v791 = vcombine.low %v719, %v726
        %v792 = vcombine.low %v733, %v740
        %v793 = vcombine.low %v747, %v754
        %v794 = vcombine.low %v761, %v768
        %v795 = vrot.slane %v792, 7
        %vm796 = vcmask 1041409
        %v797 = vsel %vm796, %v795, %v791
        %vm798 = vcmask 1045509
        %v799 = vsel %vm798, %v795, %v797
        %v800 = vrot.slane %v793, 6
        %vm801 = vcmask 1042434
        %v802 = vsel %vm801, %v800, %v799
        %vm803 = vcmask 1046534
        %v804 = vsel %vm803, %v800, %v802
        %v805 = vrot.slane %v794, 5
        %vm806 = vcmask 1043459
        %v807 = vsel %vm806, %v805, %v804
        %vm808 = vcmask 1047559
        %v809 = vsel %vm808, %v805, %v807
        %811 = vst [vmem:[%s264] sm:$0xff] %v809
        %v814 = vcombine.low %v775, %v782
        %v816 = vunpack.c.l.s4 1966171168
        %v817 = vunpack.c.0.s8 %v816
        %v818 = vlaneseq
        %v819 = vshrl.u32 %v818, 7
        %v820 = vsub.s32 %v817, %v819
        %v821 = vrot.slane %v814, %v820
        %v823 = vunpack.c.l.s4 1966171168
        %v824 = vunpack.c.0.s8 %v823
        %v825 = vlaneseq
        %v826 = vshrl.u32 %v825, 7
        %v827 = vsub.s32 %v824, %v826
        %v828 = vrot.slane %v821, %v827
        %v830 = vlaneseq
        %vm831 = vcmp.ge.s32.totalorder %v830, 0
        %vm832 = vcmp.lt.s32.totalorder %v830, 256
        %vm833 = vmand %vm831, %vm832
        %834 = vst.msk [vmem:[%s271] sm:$0x3] %vm833, %v828
        %s835 = sand.u32 %s119, 1
        %s836 = scalar_lea.sflag [#allocation4], %s835
        %s837 = sand.u32 %s119, 1
        %s838 = smul.addr %s837, 8
        %s839 = scalar_lea.vmem [#allocation9], %s838
        %s840 = sand.u32 %s147, 1
        %s841 = scalar_lea.sflag [#allocation11], %s840
        %s842 = sand.u32 %s147, 1
        %s843 = smul.addr %s842, 2
        %s844 = scalar_lea.vmem [#allocation10], %s843
        // Predicated region
        $region45: #{tpu_custom_call.1} parent=31 // pred_check
          %p845 = pneg %p129
        $region46: #{tpu_custom_call.1} parent=31 // pred_check_branch
          %847 = sbr.rel (%p845) target = $region48
        $region47: #{tpu_custom_call.1} parent=31 // pred_region
          %s848 = smul.u32 2, %s32
          %s850 = ssub.s32 128, 128
          %851 = vsyncadd %s836, %s850
          %s852 = smul.addr %s31, 2
          %s853 = sadd.s32 %s848, %s852
          %s854 = smul.addr %s853, 64
          %s855 = scalar_lea.hbm %s3, %s854
          %s857 = sshll.u32 %s839, 4
          %s858 = int_to_ptr.vmem [resolvable:$true] %s857
          %860 = dma.vmem_to_hbm [thread:$0]  %s858, 128, %s855, %s836
        $region48: #{tpu_custom_call.1} parent=31 // pred_fallthru
          _
        // Predicated region
        $region49: #{tpu_custom_call.1} parent=31 // pred_check
          %p861 = pneg %p157
        $region50: #{tpu_custom_call.1} parent=31 // pred_check_branch
          %863 = sbr.rel (%p861) target = $region52
        $region51: #{tpu_custom_call.1} parent=31 // pred_region
          %s864 = smul.u32 2, %s32
          %s866 = ssub.s32 32, 32
          %867 = vsyncadd %s841, %s866
          %s868 = smul.addr %s31, 2
          %s869 = sadd.s32 %s864, %s868
          %s870 = smul.addr %s869, 16
          %s871 = scalar_lea.hbm %s4, %s870
          %s873 = sshll.u32 %s844, 4
          %s874 = int_to_ptr.vmem [resolvable:$true] %s873
          %876 = dma.vmem_to_hbm [thread:$0]  %s874, 32, %s871, %s841
        $region52: #{tpu_custom_call.1} parent=31 // pred_fallthru
          _
      $region32: #{tpu_custom_call.1} parent=5 // pred_fallthru
        _
      %p877 = scmp.le.s32.totalorder 2, %s22
      // Predicated region
      $region53: #{tpu_custom_call.1} parent=5 // pred_check
        %p878 = pneg %p877
      $region54: #{tpu_custom_call.1} parent=5 // pred_check_branch
        %880 = sbr.rel (%p878) target = $region56
      $region55: #{tpu_custom_call.1} parent=5 // pred_region
        %s881 = ssub.s32 %s22, 2
        // Predicated region
        $region57: #{tpu_custom_call.1} parent=55 // pred_check
          %p882 = pneg %p135
        $region58: #{tpu_custom_call.1} parent=55 // pred_check_branch
          %884 = sbr.rel (%p882) target = $region60
        $region59: #{tpu_custom_call.1} parent=55 // pred_region
          %s885 = sand.u32 %s120, 1
          %s886 = scalar_lea.sflag [#allocation4], %s885
          %s887 = sand.u32 %s120, 1
          %s888 = smul.addr %s887, 8
          %s889 = scalar_lea.vmem [#allocation9], %s888
          %890 = dma.done %s886, 128
        $region60: #{tpu_custom_call.1} parent=55 // pred_fallthru
          _
        // Predicated region
        $region61: #{tpu_custom_call.1} parent=55 // pred_check
          %p891 = pneg %p163
        $region62: #{tpu_custom_call.1} parent=55 // pred_check_branch
          %893 = sbr.rel (%p891) target = $region64
        $region63: #{tpu_custom_call.1} parent=55 // pred_region
          %s894 = sand.u32 %s148, 1
          %s895 = scalar_lea.sflag [#allocation11], %s894
          %s896 = sand.u32 %s148, 1
          %s897 = smul.addr %s896, 2
          %s898 = scalar_lea.vmem [#allocation10], %s897
          %899 = dma.done %s895, 32
        $region64: #{tpu_custom_call.1} parent=55 // pred_fallthru
          _
      $region56: #{tpu_custom_call.1} parent=5 // pred_fallthru
        _
    $region6: #{tpu_custom_call.1} parent=1 // loop_footer
      %s26 = sadd.s32 1, %s22
    $region7: #{tpu_custom_call.1} parent=1 // loop_footer_branch
      %21 = sbr.rel target = $region3
    $region8: #{tpu_custom_call.1} parent=1 // loop_exit
      _
    %900 = vsyncpa [#allocation3], 1
    %s901 = scalar_lea.sflag [#allocation3], 1
    %902 = vsyncpa %s901, 1
    %903 = vsyncpa [#allocation8], 1
    %904 = vsyncpa [#allocation4], 1
    %s905 = scalar_lea.sflag [#allocation4], 1
    %906 = vsyncpa %s905, 1
    %907 = vsyncpa [#allocation11], 1
    %s908 = scalar_lea.sflag [#allocation11], 1
    %909 = vsyncpa %s908, 1
    %910 = vsyncpa [#allocation5], 1
    %s911 = scalar_lea.sflag [#allocation5], 1
    %912 = vsyncpa %s911, 1

// kernel: tpu_custom_call.1
$region0: #{tpu_custom_call.1}
  #allocation0 [shape = 'u32[]', space=smem, size = 0x4, offset = 0x4, fixed_abs, tag = 'smem constant byte address 0x4 - core index']
  #allocation1 [shape = 'u32[144,128]{1,0:T(1,128)}', space=vmem, size = 0x12000, scoped, tag = 'internal scratch']
  %s0 = inlined_call_operand.hbm [shape: f32[2,9], index: 0, kind: input, shape index: {}]
  %s1 = inlined_call_operand.hbm [shape: f32[2,2,256], index: 1, kind: input, shape index: {}]
  %s2 = inlined_call_operand.hbm [shape: bf16[80,128], index: 2, kind: input, shape index: {}]
  %s3 = inlined_call_operand.hbm [shape: f32[2,4,256], index: 3, kind: output, shape index: {0}]
  %s4 = inlined_call_operand.hbm [shape: f32[2,1,256], index: 4, kind: output, shape index: {1}]
  %5 = xla_tuple %s3, %s4
  %s6 = sld [smem:[#allocation0]]
  $region65: #{tpu_custom_call.1} parent=0
    _
  %s8 = ssub.s32 1, %s6
  %s9 = scalar_select 0, %s8, %s6
  $region1: #{tpu_custom_call.1} parent=0
    #allocation2 [shape = 'u8[1024]{0}', space=smem, size = 0x400, scoped, tag = 'input window, operand 0, single buffered']
    #allocation3 [shape = 's32[2]{0}', space=sflag, size = 0x8, scoped, tag = 'scoped memory for tpu_custom_call.1']
    #allocation4 [shape = 's32[2]{0}', space=sflag, size = 0x8, scoped, tag = 'scoped memory for tpu_custom_call.1']
    #allocation5 [shape = 's32[2]{0}', space=sflag, size = 0x8, scoped, tag = 'scoped memory for tpu_custom_call.1']
    #allocation6 [shape = 'u8[4096]{0}', space=vmem, size = 0x1000, scoped, tag = 'input window, operand 1']
    #allocation7 [shape = 'u8[20480]{0}', space=vmem, size = 0x5000, scoped, tag = 'input window, operand 2, single buffered']
    #allocation8 [shape = 's32[1]{0}', space=sflag, size = 0x4, scoped, tag = 'scoped memory for tpu_custom_call.1']
    #allocation9 [shape = 'u8[8192]{0}', space=vmem, size = 0x2000, scoped, tag = 'output window, operand 0']
    #allocation10 [shape = 'u8[2048]{0}', space=vmem, size = 0x800, scoped, tag = 'output window, operand 1']
    #allocation11 [shape = 's32[2]{0}', space=sflag, size = 0x8, scoped, tag = 'scoped memory for tpu_custom_call.1']
    %10 = vsyncpa [#allocation5], 0
    %11 = vsyncpa [#allocation3], 0
    %s12 = scalar_lea.sflag [#allocation3], 1
    %13 = vsyncpa %s12, 0
    %14 = vsyncpa [#allocation8], 0
    %15 = vsyncpa [#allocation4], 0
    %s16 = scalar_lea.sflag [#allocation4], 1
    %17 = vsyncpa %s16, 0
    %18 = vsyncpa [#allocation11], 0
    %s19 = scalar_lea.sflag [#allocation11], 1
    %20 = vsyncpa %s19, 0
    loop: start=0, step=1, limit=4
    $region2: #{tpu_custom_call.1} parent=1 // loop_pre_header
      _
    $region3: #{tpu_custom_call.1} parent=1 // loop_header
      %s22 = sphi 0, %s26
      %p23 = scmp.ge.s32.totalorder %s22, 4
      %s29 = sphi 0, %s41
      %s30 = sphi 0, %s37
      %s31 = sphi 0, %s29
      %s32 = sphi 0, %s30
      %s33 = sphi 0, %s31
      %s34 = sphi 0, %s32
      %s42 = sphi 0, %s42
      %s44 = sphi 0, %s42
      %s45 = sphi 0, %s44
      %s59 = sphi 0, %s45
      %s67 = sphi 0, %s69
      %s70 = sphi 0, %s67
      %s71 = sphi 0, %s70
      %s87 = sphi 0, %s71
      %s91 = sphi 0, %s91
      %s93 = sphi 0, %s91
      %s94 = sphi 0, %s93
      %s108 = sphi 0, %s94
      %s116 = sphi 0, %s118
      %s119 = sphi 0, %s116
      %s120 = sphi 0, %s119
      %s136 = sphi 0, %s120
      %s144 = sphi 0, %s146
      %s147 = sphi 0, %s144
      %s148 = sphi 0, %s147
      %s164 = sphi 0, %s148
    $region4: #{tpu_custom_call.1} parent=1 // loop_header_branch
      %25 = sbr.rel (%p23) target = $region8
    $region5: #{tpu_custom_call.1} parent=1 // loop_body
      %s27 = ssub.s32 %s22, 1
      %s28 = ssub.s32 %s22, 2
      %s35 = sadd.s32 1, %s30
      %p36 = scmp.ge.s32.totalorder %s35, 1
      %s37 = scalar_select %p36, 0, %s35
      %s38 = sadd.s32 1, %s29
      %s39 = scalar_select %p36, %s38, %s29
      %p40 = scmp.ge.s32.totalorder %s39, 2
      %s41 = scalar_select %p40, 0, %s39
      %s43 = sadd.s32 %s42, 1
      %p46 = scmp.eq.s32.totalorder %s22, 1
      %p47 = scmp.ne.s32.totalorder %s42, %s44
      %p48 = scmp.eq.s32.totalorder %s22, 0
      %p49 = por %p47, %p48
      %p50 = scmp.ne.s32.totalorder %s42, %s44
      %p51 = scmp.eq.s32.totalorder %s27, 1
      %p52 = por %p50, %p51
      %p53 = scmp.ne.s32.totalorder %s44, %s45
      %p54 = scmp.eq.s32.totalorder %s27, 0
      %p55 = por %p53, %p54
      %p56 = scmp.ne.s32.totalorder %s44, %s45
      %p57 = scmp.eq.s32.totalorder %s28, 1
      %p58 = por %p56, %p57
      %p60 = scmp.ne.s32.totalorder %s45, %s59
      %p61 = scmp.eq.s32.totalorder %s28, 0
      %p62 = por %p60, %p61
      %s63 = ssub.s32 %s29, %s41
      %s64 = ssub.s32 %s30, %s37
      %s65 = sor.u32 %s63, %s64
      %p66 = scmp.eq.s32.totalorder %s65, 0
      %s68 = sadd.s32 %s67, 1
      %s69 = scalar_select %p66, %s67, %s68
      %p72 = pneg %p66
      %p73 = scmp.eq.s32.totalorder %s22, 1
      %p74 = por %p72, %p73
      %p75 = scmp.ne.s32.totalorder %s67, %s70
      %p76 = scmp.eq.s32.totalorder %s22, 0
      %p77 = por %p75, %p76
      %p78 = scmp.ne.s32.totalorder %s67, %s70
      %p79 = scmp.eq.s32.totalorder %s27, 1
      %p80 = por %p78, %p79
      %p81 = scmp.ne.s32.totalorder %s70, %s71
      %p82 = scmp.eq.s32.totalorder %s27, 0
      %p83 = por %p81, %p82
      %p84 = scmp.ne.s32.totalorder %s70, %s71
      %p85 = scmp.eq.s32.totalorder %s28, 1
      %p86 = por %p84, %p85
      %p88 = scmp.ne.s32.totalorder %s71, %s87
      %p89 = scmp.eq.s32.totalorder %s28, 0
      %p90 = por %p88, %p89
      %s92 = sadd.s32 %s91, 1
      %p95 = scmp.eq.s32.totalorder %s22, 1
      %p96 = scmp.ne.s32.totalorder %s91, %s93
      %p97 = scmp.eq.s32.totalorder %s22, 0
      %p98 = por %p96, %p97
      %p99 = scmp.ne.s32.totalorder %s91, %s93
      %p100 = scmp.eq.s32.totalorder %s27, 1
      %p101 = por %p99, %p100
      %p102 = scmp.ne.s32.totalorder %s93, %s94
      %p103 = scmp.eq.s32.totalorder %s27, 0
      %p104 = por %p102, %p103
      %p105 = scmp.ne.s32.totalorder %s93, %s94
      %p106 = scmp.eq.s32.totalorder %s28, 1
      %p107 = por %p105, %p106
      %p109 = scmp.ne.s32.totalorder %s94, %s108
      %p110 = scmp.eq.s32.totalorder %s28, 0
      %p111 = por %p109, %p110
      %s112 = ssub.s32 %s29, %s41
      %s113 = ssub.s32 %s30, %s37
      %s114 = sor.u32 %s112, %s113
      %p115 = scmp.eq.s32.totalorder %s114, 0
      %s117 = sadd.s32 %s116, 1
      %s118 = scalar_select %p115, %s116, %s117
      %p121 = pneg %p115
      %p122 = scmp.eq.s32.totalorder %s22, 1
      %p123 = por %p121, %p122
      %p124 = scmp.ne.s32.totalorder %s116, %s119
      %p125 = scmp.eq.s32.totalorder %s22, 0
      %p126 = por %p124, %p125
      %p127 = scmp.ne.s32.totalorder %s116, %s119
      %p128 = scmp.eq.s32.totalorder %s27, 1
      %p129 = por %p127, %p128
      %p130 = scmp.ne.s32.totalorder %s119, %s120
      %p131 = scmp.eq.s32.totalorder %s27, 0
      %p132 = por %p130, %p131
      %p133 = scmp.ne.s32.totalorder %s119, %s120
      %p134 = scmp.eq.s32.totalorder %s28, 1
      %p135 = por %p133, %p134
      %p137 = scmp.ne.s32.totalorder %s120, %s136
      %p138 = scmp.eq.s32.totalorder %s28, 0
      %p139 = por %p137, %p138
      %s140 = ssub.s32 %s29, %s41
      %s141 = ssub.s32 %s30, %s37
      %s142 = sor.u32 %s140, %s141
      %p143 = scmp.eq.s32.totalorder %s142, 0
      %s145 = sadd.s32 %s144, 1
      %s146 = scalar_select %p143, %s144, %s145
      %p149 = pneg %p143
      %p150 = scmp.eq.s32.totalorder %s22, 1
      %p151 = por %p149, %p150
      %p152 = scmp.ne.s32.totalorder %s144, %s147
      %p153 = scmp.eq.s32.totalorder %s22, 0
      %p154 = por %p152, %p153
      %p155 = scmp.ne.s32.totalorder %s144, %s147
      %p156 = scmp.eq.s32.totalorder %s27, 1
      %p157 = por %p155, %p156
      %p158 = scmp.ne.s32.totalorder %s147, %s148
      %p159 = scmp.eq.s32.totalorder %s27, 0
      %p160 = por %p158, %p159
      %p161 = scmp.ne.s32.totalorder %s147, %s148
      %p162 = scmp.eq.s32.totalorder %s28, 1
      %p163 = por %p161, %p162
      %p165 = scmp.ne.s32.totalorder %s148, %s164
      %p166 = scmp.eq.s32.totalorder %s28, 0
      %p167 = por %p165, %p166
      %p168 = scmp.le.s32.totalorder 1, %s22
      %p169 = scmp.lt.s32.totalorder %s22, 3
      %p170 = pnand %p168, %p169
      %p171 = pneg %p170
      // Predicated region
      $region9: #{tpu_custom_call.1} parent=5 // pred_check
        _
      $region10: #{tpu_custom_call.1} parent=5 // pred_check_branch
        %173 = sbr.rel (%p170) target = $region12
      $region11: #{tpu_custom_call.1} parent=5 // pred_region
        %s174 = ssub.s32 %s22, 1
        // Predicated region
        $region13: #{tpu_custom_call.1} parent=11 // pred_check
          %p175 = pneg %p55
        $region14: #{tpu_custom_call.1} parent=11 // pred_check_branch
          %177 = sbr.rel (%p175) target = $region16
        $region15: #{tpu_custom_call.1} parent=11 // pred_region
          %s179 = ssub.s32 32, 32
          %180 = vsyncadd [#allocation5], %s179
          %183 = dma.hbm_to_smem %s0, 32, [#allocation2], [#allocation5]
        $region16: #{tpu_custom_call.1} parent=11 // pred_fallthru
          _
        // Predicated region
        $region17: #{tpu_custom_call.1} parent=11 // pred_check
          %p184 = pneg %p104
        $region18: #{tpu_custom_call.1} parent=11 // pred_check_branch
          %186 = sbr.rel (%p184) target = $region20
        $region19: #{tpu_custom_call.1} parent=11 // pred_region
          %s188 = ssub.s32 640, 640
          %189 = vsyncadd [#allocation8], %s188
          %s190 = sshll.u32 [#allocation7], 4
          %s191 = int_to_ptr.vmem [resolvable:$true] %s190
          %196 = dma.hbm_to_vmem [thread:$0]  %s2, 640, %s191, [#allocation8], 64, 64, 4
        $region20: #{tpu_custom_call.1} parent=11 // pred_fallthru
          _
      $region12: #{tpu_custom_call.1} parent=5 // pred_fallthru
        _
      %p197 = scmp.lt.s32.totalorder %s22, 2
      // Predicated region
      $region21: #{tpu_custom_call.1} parent=5 // pred_check
        %p198 = pneg %p197
      $region22: #{tpu_custom_call.1} parent=5 // pred_check_branch
        %200 = sbr.rel (%p198) target = $region24
      $region23: #{tpu_custom_call.1} parent=5 // pred_region
        // Predicated region
        $region25: #{tpu_custom_call.1} parent=23 // pred_check
          %p201 = pneg %p77
        $region26: #{tpu_custom_call.1} parent=23 // pred_check_branch
          %203 = sbr.rel (%p201) target = $region28
        $region27: #{tpu_custom_call.1} parent=23 // pred_region
          %s204 = sand.u32 %s67, 1
          %s205 = scalar_lea.sflag [#allocation3], %s204
          %s206 = sand.u32 %s67, 1
          %s207 = smul.addr %s206, 4
          %s208 = scalar_lea.vmem [#allocation6], %s207
          %s209 = smul.u32 2, %s30
          %s211 = ssub.s32 64, 64
          %212 = vsyncadd %s205, %s211
          %s213 = smul.addr %s29, 2
          %s214 = sadd.s32 %s209, %s213
          %s215 = smul.addr %s214, 32
          %s216 = scalar_lea.hbm %s1, %s215
          %s218 = sshll.u32 %s208, 4
          %s219 = int_to_ptr.vmem [resolvable:$true] %s218
          %221 = dma.hbm_to_vmem [thread:$0]  %s216, 64, %s219, %s205
        $region28: #{tpu_custom_call.1} parent=23 // pred_fallthru
          _
      $region24: #{tpu_custom_call.1} parent=5 // pred_fallthru
        _
      %p222 = scmp.le.s32.totalorder 1, %s22
      %p223 = scmp.lt.s32.totalorder %s22, 3
      %p224 = pnand %p222, %p223
      %p225 = pneg %p224
      // Predicated region
      $region29: #{tpu_custom_call.1} parent=5 // pred_check
        _
      $region30: #{tpu_custom_call.1} parent=5 // pred_check_branch
        %227 = sbr.rel (%p224) target = $region32
      $region31: #{tpu_custom_call.1} parent=5 // pred_region
        %s228 = ssub.s32 %s22, 1
        // Predicated region
        $region33: #{tpu_custom_call.1} parent=31 // pred_check
          %p229 = pneg %p55
        $region34: #{tpu_custom_call.1} parent=31 // pred_check_branch
          %231 = sbr.rel (%p229) target = $region36
        $region35: #{tpu_custom_call.1} parent=31 // pred_region
          %232 = dma.done [#allocation5], 32
        $region36: #{tpu_custom_call.1} parent=31 // pred_fallthru
          _
        %s233 = sand.u32 %s70, 1
        %s234 = scalar_lea.sflag [#allocation3], %s233
        %s235 = sand.u32 %s70, 1
        %s236 = smul.addr %s235, 4
        %s237 = scalar_lea.vmem [#allocation6], %s236
        // Predicated region
        $region37: #{tpu_custom_call.1} parent=31 // pred_check
          %p238 = pneg %p83
        $region38: #{tpu_custom_call.1} parent=31 // pred_check_branch
          %240 = sbr.rel (%p238) target = $region40
        $region39: #{tpu_custom_call.1} parent=31 // pred_region
          %241 = dma.done %s234, 64
        $region40: #{tpu_custom_call.1} parent=31 // pred_fallthru
          _
        // Predicated region
        $region41: #{tpu_custom_call.1} parent=31 // pred_check
          %p242 = pneg %p104
        $region42: #{tpu_custom_call.1} parent=31 // pred_check_branch
          %244 = sbr.rel (%p242) target = $region44
        $region43: #{tpu_custom_call.1} parent=31 // pred_region
          %245 = dma.done [#allocation8], 640
        $region44: #{tpu_custom_call.1} parent=31 // pred_fallthru
          _
        %246 = sfence
        %p247 = pneg %p55
        %p248 = pneg %p52
        %s249 = sand.u32 %s70, 1
        %s250 = scalar_lea.sflag [#allocation3], %s249
        %s251 = sand.u32 %s70, 1
        %s252 = smul.addr %s251, 4
        %s253 = scalar_lea.vmem [#allocation6], %s252
        %p254 = pneg %p83
        %p255 = pneg %p80
        %p256 = pneg %p104
        %p257 = pneg %p101
        %p258 = pneg %p132
        %p259 = pneg %p129
        %s260 = sand.u32 %s119, 1
        %s261 = scalar_lea.sflag [#allocation4], %s260
        %s262 = sand.u32 %s119, 1
        %s263 = smul.addr %s262, 8
        %s264 = scalar_lea.vmem [#allocation9], %s263
        %p265 = pneg %p160
        %p266 = pneg %p157
        %s267 = sand.u32 %s147, 1
        %s268 = scalar_lea.sflag [#allocation11], %s267
        %s269 = sand.u32 %s147, 1
        %s270 = smul.addr %s269, 2
        %s271 = scalar_lea.vmem [#allocation10], %s270
        %s272 = smul.u32 2, %s32
        %s273 = smul.u32 2, %s32
        %s274 = smul.u32 2, %s32
        %v276 = vld [vmem:[%s237] sm:$0xf]
        %s277 = smul.u32 %s31, 128
        %s278 = sld [smem:[#allocation2 + %s277]]
        %v279 = vstv %s278
        %v280 = vmul.f32 %v279, %v276
        %s281 = sadd.s32 %s277, 1
        %s282 = sld [smem:[#allocation2 + %s281]]
        %v283 = vstv %s282
        %v284 = vmul.f32 %v283, %v276
        %v286 = vrot.slane %v284, 7
        %v287 = vrot.slane %v286, 2
        %v289 = vadd.f32 %v280, %v287
        %s290 = sadd.s32 %s277, 2
        %s291 = sld [smem:[#allocation2 + %s290]]
        %v292 = vstv %s291
        %v293 = vadd.f32 %v289, %v292
        %s294 = sadd.s32 %s277, 3
        %s295 = sld [smem:[#allocation2 + %s294]]
        %v296 = vstv %s295
        %v297 = vmul.f32 %v296, %v276
        %s298 = sadd.s32 %s277, 4
        %s299 = sld [smem:[#allocation2 + %s298]]
        %v300 = vstv %s299
        %v301 = vmul.f32 %v300, %v276
        %v303 = vrot.slane %v301, 7
        %v304 = vrot.slane %v303, 2
        %v306 = vadd.f32 %v297, %v304
        %s307 = sadd.s32 %s277, 5
        %s308 = sld [smem:[#allocation2 + %s307]]
        %v309 = vstv %s308
        %v310 = vadd.f32 %v306, %v309
        %s311 = sadd.s32 %s277, 6
        %s312 = sld [smem:[#allocation2 + %s311]]
        %v313 = vstv %s312
        %v314 = vmul.f32 %v313, %v276
        %s315 = sadd.s32 %s277, 7
        %s316 = sld [smem:[#allocation2 + %s315]]
        %v317 = vstv %s316
        %v318 = vmul.f32 %v317, %v276
        %v320 = vrot.slane %v318, 7
        %v321 = vrot.slane %v320, 2
        %v323 = vadd.f32 %v314, %v321
        %s324 = sadd.s32 %s277, 8
        %s325 = sld [smem:[#allocation2 + %s324]]
        %v326 = vstv %s325
        %v327 = vadd.f32 %v323, %v326
        %v328 = vand.u32 2147483647, %v327
        %vm329 = vcmp.lt.f32.partialorder %v328, 1e-06
        %v330 = vsel %vm329, 1.0, %v327
        %v331 = vrcp.pop %v330
        %v332 = vmul.f32 %v330, %v331
        %v333 = vsub.f32 2.0, %v332
        %v334 = vmul.f32 %v331, %v333
        %v335 = vmul.f32 %v293, %v334
        %v336 = vsel %vm329, -1000000.0, %v335
        %v337 = vmul.f32 %v310, %v334
        %v338 = vsel %vm329, -1000000.0, %v337
        %v339 = vlaneseq
        %v340 = vshrl.u32 %v339, 7
        %v341 = vadd.s32 %v340, 8
        %v342 = vadd.s32 %v340, 16
        %v343 = vadd.s32 %v340, 24
        %v344 = vadd.s32 %v340, 32
        %v345 = vadd.s32 %v340, 40
        %v346 = vadd.s32 %v340, 48
        %v347 = vadd.s32 %v340, 56
        %v348 = vadd.s32 %v340, 64
        %v349 = vadd.s32 %v340, 72
        %v350 = vadd.s32 %v340, 80
        %v351 = vadd.s32 %v340, 88
        %v352 = vadd.s32 %v340, 96
        %v353 = vadd.s32 %v340, 104
        %v354 = vadd.s32 %v340, 112
        %v355 = vadd.s32 %v340, 120
        %v356 = vcvt.s32.f32 %v340
        %v357 = vcvt.s32.f32 %v341
        %v358 = vcvt.s32.f32 %v342
        %v359 = vcvt.s32.f32 %v343
        %v360 = vcvt.s32.f32 %v344
        %v361 = vcvt.s32.f32 %v345
        %v362 = vcvt.s32.f32 %v346
        %v363 = vcvt.s32.f32 %v347
        %v364 = vcvt.s32.f32 %v348
        %v365 = vcvt.s32.f32 %v349
        %v366 = vcvt.s32.f32 %v350
        %v367 = vcvt.s32.f32 %v351
        %v368 = vcvt.s32.f32 %v352
        %v369 = vcvt.s32.f32 %v353
        %v370 = vcvt.s32.f32 %v354
        %v371 = vcvt.s32.f32 %v355
        %v373 = vlaneseq
        %v374 = vshrl.u32 %v373, 7
        %v375 = vsub.s32 0, %v374
        %v376 = vrot.slane %v336, %v375
        %v377 = vlaneseq
        %v378 = vshrl.u32 %v377, 7
        %v379 = vsub.s32 2, %v378
        %v380 = vrot.slane %v336, %v379
        %v383 = vlaneseq
        %v384 = vshrl.u32 %v383, 7
        %v385 = vsub.s32 0, %v384
        %v386 = vrot.slane %v376, %v385
        %v387 = vlaneseq
        %v388 = vshrl.u32 %v387, 7
        %v389 = vsub.s32 0, %v388
        %v390 = vrot.slane %v380, %v389
        %v391 = vsub.f32 %v386, %v356
        %v392 = vsub.f32 %v390, %v356
        %v393 = vsub.f32 %v386, %v357
        %v394 = vsub.f32 %v390, %v357
        %v395 = vsub.f32 %v386, %v358
        %v396 = vsub.f32 %v390, %v358
        %v397 = vsub.f32 %v386, %v359
        %v398 = vsub.f32 %v390, %v359
        %v399 = vsub.f32 %v386, %v360
        %v400 = vsub.f32 %v390, %v360
        %v401 = vsub.f32 %v386, %v361
        %v402 = vsub.f32 %v390, %v361
        %v403 = vsub.f32 %v386, %v362
        %v404 = vsub.f32 %v390, %v362
        %v405 = vsub.f32 %v386, %v363
        %v406 = vsub.f32 %v390, %v363
        %v407 = vsub.f32 %v386, %v364
        %v408 = vsub.f32 %v390, %v364
        %v409 = vsub.f32 %v386, %v365
        %v410 = vsub.f32 %v390, %v365
        %v411 = vsub.f32 %v386, %v366
        %v412 = vsub.f32 %v390, %v366
        %v413 = vsub.f32 %v386, %v367
        %v414 = vsub.f32 %v390, %v367
        %v415 = vsub.f32 %v386, %v368
        %v416 = vsub.f32 %v390, %v368
        %v417 = vsub.f32 %v386, %v369
        %v418 = vsub.f32 %v390, %v369
        %v419 = vsub.f32 %v386, %v370
        %v420 = vsub.f32 %v390, %v370
        %v421 = vsub.f32 %v386, %v371
        %v422 = vsub.f32 %v390, %v371
        %v423 = vand.u32 2147483647, %v391
        %v424 = vand.u32 2147483647, %v392
        %v425 = vand.u32 2147483647, %v393
        %v426 = vand.u32 2147483647, %v394
        %v427 = vand.u32 2147483647, %v395
        %v428 = vand.u32 2147483647, %v396
        %v429 = vand.u32 2147483647, %v397
        %v430 = vand.u32 2147483647, %v398
        %v431 = vand.u32 2147483647, %v399
        %v432 = vand.u32 2147483647, %v400
        %v433 = vand.u32 2147483647, %v401
        %v434 = vand.u32 2147483647, %v402
        %v435 = vand.u32 2147483647, %v403
        %v436 = vand.u32 2147483647, %v404
        %v437 = vand.u32 2147483647, %v405
        %v438 = vand.u32 2147483647, %v406
        %v439 = vand.u32 2147483647, %v407
        %v440 = vand.u32 2147483647, %v408
        %v441 = vand.u32 2147483647, %v409
        %v442 = vand.u32 2147483647, %v410
        %v443 = vand.u32 2147483647, %v411
        %v444 = vand.u32 2147483647, %v412
        %v445 = vand.u32 2147483647, %v413
        %v446 = vand.u32 2147483647, %v414
        %v447 = vand.u32 2147483647, %v415
        %v448 = vand.u32 2147483647, %v416
        %v449 = vand.u32 2147483647, %v417
        %v450 = vand.u32 2147483647, %v418
        %v451 = vand.u32 2147483647, %v419
        %v452 = vand.u32 2147483647, %v420
        %v453 = vand.u32 2147483647, %v421
        %v454 = vand.u32 2147483647, %v422
        %v455 = vsub.f32 1.0, %v423
        %v456 = vsub.f32 1.0, %v424
        %v457 = vsub.f32 1.0, %v425
        %v458 = vsub.f32 1.0, %v426
        %v459 = vsub.f32 1.0, %v427
        %v460 = vsub.f32 1.0, %v428
        %v461 = vsub.f32 1.0, %v429
        %v462 = vsub.f32 1.0, %v430
        %v463 = vsub.f32 1.0, %v431
        %v464 = vsub.f32 1.0, %v432
        %v465 = vsub.f32 1.0, %v433
        %v466 = vsub.f32 1.0, %v434
        %v467 = vsub.f32 1.0, %v435
        %v468 = vsub.f32 1.0, %v436
        %v469 = vsub.f32 1.0, %v437
        %v470 = vsub.f32 1.0, %v438
        %v471 = vsub.f32 1.0, %v439
        %v472 = vsub.f32 1.0, %v440
        %v473 = vsub.f32 1.0, %v441
        %v474 = vsub.f32 1.0, %v442
        %v475 = vsub.f32 1.0, %v443
        %v476 = vsub.f32 1.0, %v444
        %v477 = vsub.f32 1.0, %v445
        %v478 = vsub.f32 1.0, %v446
        %v479 = vsub.f32 1.0, %v447
        %v480 = vsub.f32 1.0, %v448
        %v481 = vsub.f32 1.0, %v449
        %v482 = vsub.f32 1.0, %v450
        %v483 = vsub.f32 1.0, %v451
        %v484 = vsub.f32 1.0, %v452
        %v485 = vsub.f32 1.0, %v453
        %v486 = vsub.f32 1.0, %v454
        %v487 = vmax.f32 %v455, 0.0
        %v488 = vmax.f32 %v456, 0.0
        %v489 = vmax.f32 %v457, 0.0
        %v490 = vmax.f32 %v458, 0.0
        %v491 = vmax.f32 %v459, 0.0
        %v492 = vmax.f32 %v460, 0.0
        %v493 = vmax.f32 %v461, 0.0
        %v494 = vmax.f32 %v462, 0.0
        %v495 = vmax.f32 %v463, 0.0
        %v496 = vmax.f32 %v464, 0.0
        %v497 = vmax.f32 %v465, 0.0
        %v498 = vmax.f32 %v466, 0.0
        %v499 = vmax.f32 %v467, 0.0
        %v500 = vmax.f32 %v468, 0.0
        %v501 = vmax.f32 %v469, 0.0
        %v502 = vmax.f32 %v470, 0.0
        %v503 = vmax.f32 %v471, 0.0
        %v504 = vmax.f32 %v472, 0.0
        %v505 = vmax.f32 %v473, 0.0
        %v506 = vmax.f32 %v474, 0.0
        %v507 = vmax.f32 %v475, 0.0
        %v508 = vmax.f32 %v476, 0.0
        %v509 = vmax.f32 %v477, 0.0
        %v510 = vmax.f32 %v478, 0.0
        %v511 = vmax.f32 %v479, 0.0
        %v512 = vmax.f32 %v480, 0.0
        %v513 = vmax.f32 %v481, 0.0
        %v514 = vmax.f32 %v482, 0.0
        %v515 = vmax.f32 %v483, 0.0
        %v516 = vmax.f32 %v484, 0.0
        %v517 = vmax.f32 %v485, 0.0
        %v518 = vmax.f32 %v486, 0.0
        %v520 = vlaneseq
        %v521 = vshrl.u32 %v520, 7
        %v522 = vsub.s32 0, %v521
        %v523 = vrot.slane %v338, %v522
        %v524 = vlaneseq
        %v525 = vshrl.u32 %v524, 7
        %v526 = vsub.s32 2, %v525
        %v527 = vrot.slane %v338, %v526
        %v530 = vlaneseq
        %v531 = vshrl.u32 %v530, 7
        %v532 = vsub.s32 0, %v531
        %v533 = vrot.slane %v523, %v532
        %v534 = vlaneseq
        %v535 = vshrl.u32 %v534, 7
        %v536 = vsub.s32 0, %v535
        %v537 = vrot.slane %v527, %v536
        %v538 = vsub.f32 %v533, %v356
        %v539 = vsub.f32 %v537, %v356
        %v540 = vsub.f32 %v533, %v357
        %v541 = vsub.f32 %v537, %v357
        %v542 = vand.u32 2147483647, %v538
        %v543 = vand.u32 2147483647, %v539
        %v544 = vand.u32 2147483647, %v540
        %v545 = vand.u32 2147483647, %v541
        %v546 = vsub.f32 1.0, %v542
        %v547 = vsub.f32 1.0, %v543
        %v548 = vsub.f32 1.0, %v544
        %v549 = vsub.f32 1.0, %v545
        %v550 = vmax.f32 %v546, 0.0
        %v551 = vmax.f32 %v547, 0.0
        %v552 = vmax.f32 %v548, 0.0
        %v553 = vmax.f32 %v549, 0.0
        %v554 = vld [vmem:[#allocation7] sm:$0xf]
        %v555 = vld [vmem:[#allocation7 + $0x4] sm:$0xf]
        %v556 = vld [vmem:[#allocation7 + $0x8] sm:$0xf]
        %v557 = vld [vmem:[#allocation7 + $0xc] sm:$0xf]
        %v558 = vld [vmem:[#allocation7 + $0x10] sm:$0xf]
        %v559 = vld [vmem:[#allocation7 + $0x14] sm:$0xf]
        %v560 = vld [vmem:[#allocation7 + $0x18] sm:$0xf]
        %v561 = vld [vmem:[#allocation7 + $0x1c] sm:$0xf]
        %v562 = vld [vmem:[#allocation7 + $0x20] sm:$0xf]
        %v563 = vld [vmem:[#allocation7 + $0x24] sm:$0xf]
        %v564 = vpack.c.bf16 %v489, %v487
        %v565 = vpack.c.bf16 %v490, %v488
        %v566 = vpack.c.bf16 %v493, %v491
        %v567 = vpack.c.bf16 %v494, %v492
        %v568 = vpack.c.bf16 %v497, %v495
        %v569 = vpack.c.bf16 %v498, %v496
        %v570 = vpack.c.bf16 %v501, %v499
        %v571 = vpack.c.bf16 %v502, %v500
        %v572 = vpack.c.bf16 %v505, %v503
        %v573 = vpack.c.bf16 %v506, %v504
        %v574 = vpack.c.bf16 %v509, %v507
        %v575 = vpack.c.bf16 %v510, %v508
        %v576 = vpack.c.bf16 %v513, %v511
        %v577 = vpack.c.bf16 %v514, %v512
        %v578 = vpack.c.bf16 %v517, %v515
        %v579 = vpack.c.bf16 %v518, %v516
        %v590 = vunpack.c.l.b16 %v554
        %v591 = vunpack.c.l.b16 %v555
        %v592 = vunpack.c.l.b16 %v556
        %v593 = vunpack.c.l.b16 %v557
        %v594 = vunpack.c.l.b16 %v558
        %v595 = vunpack.c.l.b16 %v559
        %v596 = vunpack.c.l.b16 %v560
        %v597 = vunpack.c.l.b16 %v561
        %v598 = vunpack.c.l.b16 %v562
        %v599 = vunpack.c.l.b16 %v563
        %v600 = vpack.c.b16 %v591, %v590
        %v601 = vpack.c.b16 %v593, %v592
        %v602 = vpack.c.b16 %v595, %v594
        %v603 = vpack.c.b16 %v597, %v596
        %v604 = vpack.c.b16 %v599, %v598
        %610 = vmatprep.subr.bf16.mxu0 %v579
        %611 = vmatpush1.bf16.msra.mxu0 %v578
        %612 = vmatprep.subr.bf16.mxu0 %v577
        %613 = vmatpush1.bf16.msra.mxu0 %v576
        %614 = vmatprep.subr.bf16.mxu0 %v575
        %615 = vmatpush1.bf16.msra.mxu0 %v574
        %616 = vmatprep.subr.bf16.mxu0 %v573
        %617 = vmatpush1.bf16.msra.mxu0 %v572
        %618 = vmatprep.subr.bf16.mxu0 %v571
        %619 = vmatpush1.bf16.msra.mxu0 %v570
        %620 = vmatprep.subr.bf16.mxu0 %v569
        %621 = vmatpush1.bf16.msra.mxu0 %v568
        %622 = vmatprep.subr.bf16.mxu0 %v567
        %623 = vmatpush1.bf16.msra.mxu0 %v566
        %624 = vmatprep.subr.bf16.mxu0 %v565
        %625 = vmatpush1.bf16.msra.mxu0 %v564
        %626 = vmatprep.subr.bf16.mxu0 0
        %627 = vmatpush2.bf16.msra.mxu0 0
        %628 = vmatprep.subr.bf16.mxu0 0
        %629 = vmatpush2.bf16.msra.mxu0 0
        %630 = vmatprep.subr.bf16.mxu0 0
        %631 = vmatpush2.bf16.msra.mxu0 0
        %632 = vmatprep.subr.bf16.mxu0 0
        %633 = vmatpush2.bf16.msra.mxu0 0
        %634 = vmatprep.subr.bf16.mxu0 0
        %635 = vmatpush2.bf16.msra.mxu0 0
        %636 = vmatprep.subr.bf16.mxu0 0
        %637 = vmatpush2.bf16.msra.mxu0 0
        %638 = vmatprep.subr.bf16.mxu0 0
        %639 = vmatpush2.bf16.msra.mxu0 0
        %640 = vmatprep.subr.bf16.mxu0 0
        %641 = vmatpush2.bf16.msra.mxu0 0
        %642 = vmatprep.mubr.bf16.mxu0 0
        %643 = vmatmul.mubr.bf16.gmra.mxu0 %v600
        %v644 = vpop.f32.mrf.mxu0
        %v645 = vadd.f32 0.0, %v644
        %v646 = vpop.f32.mrf.mxu0
        %v647 = vadd.f32 0.0, %v646
        %v648 = vpop.f32.mrf.mxu0
        %v649 = vadd.f32 0.0, %v648
        %v650 = vpop.f32.mrf.mxu0
        %v651 = vadd.f32 0.0, %v650
        %652 = vmatprep.mubr.bf16.mxu0 0
        %653 = vmatmul.mubr.bf16.gmra.mxu0 %v601
        %v654 = vpop.f32.mrf.mxu0
        %v655 = vadd.f32 0.0, %v654
        %v656 = vpop.f32.mrf.mxu0
        %v657 = vadd.f32 0.0, %v656
        %v658 = vpop.f32.mrf.mxu0
        %v659 = vadd.f32 0.0, %v658
        %v660 = vpop.f32.mrf.mxu0
        %v661 = vadd.f32 0.0, %v660
        %662 = vmatprep.mubr.bf16.mxu0 0
        %663 = vmatmul.mubr.bf16.gmra.mxu0 %v602
        %v664 = vpop.f32.mrf.mxu0
        %v665 = vadd.f32 0.0, %v664
        %v666 = vpop.f32.mrf.mxu0
        %v667 = vadd.f32 0.0, %v666
        %v668 = vpop.f32.mrf.mxu0
        %v669 = vadd.f32 0.0, %v668
        %v670 = vpop.f32.mrf.mxu0
        %v671 = vadd.f32 0.0, %v670
        %672 = vmatprep.mubr.bf16.mxu0 0
        %673 = vmatmul.mubr.bf16.gmra.mxu0 %v603
        %v674 = vpop.f32.mrf.mxu0
        %v675 = vadd.f32 0.0, %v674
        %v676 = vpop.f32.mrf.mxu0
        %v677 = vadd.f32 0.0, %v676
        %v678 = vpop.f32.mrf.mxu0
        %v679 = vadd.f32 0.0, %v678
        %v680 = vpop.f32.mrf.mxu0
        %v681 = vadd.f32 0.0, %v680
        %682 = vmatprep.mubr.bf16.mxu0 0
        %683 = vmatmul.mubr.bf16.gmra.mxu0 %v604
        %v684 = vpop.f32.mrf.mxu0
        %v685 = vadd.f32 0.0, %v684
        %v686 = vpop.f32.mrf.mxu0
        %v687 = vadd.f32 0.0, %v686
        %v688 = vpop.f32.mrf.mxu0
        %v689 = vadd.f32 0.0, %v688
        %v690 = vpop.f32.mrf.mxu0
        %v691 = vadd.f32 0.0, %v690
        %692 = vdwg.mxu0
        %v693 = vmul.f32 %v645, %v550
        %v694 = vmul.f32 %v647, %v551
        %v695 = vmul.f32 %v649, %v552
        %v696 = vmul.f32 %v651, %v553
        %v697 = vmul.f32 %v655, %v550
        %v698 = vmul.f32 %v657, %v551
        %v699 = vmul.f32 %v659, %v552
        %v700 = vmul.f32 %v661, %v553
        %v701 = vmul.f32 %v665, %v550
        %v702 = vmul.f32 %v667, %v551
        %v703 = vmul.f32 %v669, %v552
        %v704 = vmul.f32 %v671, %v553
        %v705 = vmul.f32 %v675, %v550
        %v706 = vmul.f32 %v677, %v551
        %v707 = vmul.f32 %v679, %v552
        %v708 = vmul.f32 %v681, %v553
        %v709 = vmul.f32 %v685, %v550
        %v710 = vmul.f32 %v687, %v551
        %v711 = vmul.f32 %v689, %v552
        %v712 = vmul.f32 %v691, %v553
        %v713 = vadd.f32 %v693, %v695
        %v714 = vrot.slane %v713, 4
        %v715 = vadd.f32 %v713, %v714
        %v716 = vrot.slane %v715, 2
        %v717 = vadd.f32 %v715, %v716
        %v718 = vrot.slane %v717, 1
        %v719 = vadd.f32 %v717, %v718
        %v720 = vadd.f32 %v694, %v696
        %v721 = vrot.slane %v720, 4
        %v722 = vadd.f32 %v720, %v721
        %v723 = vrot.slane %v722, 2
        %v724 = vadd.f32 %v722, %v723
        %v725 = vrot.slane %v724, 1
        %v726 = vadd.f32 %v724, %v725
        %v727 = vadd.f32 %v697, %v699
        %v728 = vrot.slane %v727, 4
        %v729 = vadd.f32 %v727, %v728
        %v730 = vrot.slane %v729, 2
        %v731 = vadd.f32 %v729, %v730
        %v732 = vrot.slane %v731, 1
        %v733 = vadd.f32 %v731, %v732
        %v734 = vadd.f32 %v698, %v700
        %v735 = vrot.slane %v734, 4
        %v736 = vadd.f32 %v734, %v735
        %v737 = vrot.slane %v736, 2
        %v738 = vadd.f32 %v736, %v737
        %v739 = vrot.slane %v738, 1
        %v740 = vadd.f32 %v738, %v739
        %v741 = vadd.f32 %v701, %v703
        %v742 = vrot.slane %v741, 4
        %v743 = vadd.f32 %v741, %v742
        %v744 = vrot.slane %v743, 2
        %v745 = vadd.f32 %v743, %v744
        %v746 = vrot.slane %v745, 1
        %v747 = vadd.f32 %v745, %v746
        %v748 = vadd.f32 %v702, %v704
        %v749 = vrot.slane %v748, 4
        %v750 = vadd.f32 %v748, %v749
        %v751 = vrot.slane %v750, 2
        %v752 = vadd.f32 %v750, %v751
        %v753 = vrot.slane %v752, 1
        %v754 = vadd.f32 %v752, %v753
        %v755 = vadd.f32 %v705, %v707
        %v756 = vrot.slane %v755, 4
        %v757 = vadd.f32 %v755, %v756
        %v758 = vrot.slane %v757, 2
        %v759 = vadd.f32 %v757, %v758
        %v760 = vrot.slane %v759, 1
        %v761 = vadd.f32 %v759, %v760
        %v762 = vadd.f32 %v706, %v708
        %v763 = vrot.slane %v762, 4
        %v764 = vadd.f32 %v762, %v763
        %v765 = vrot.slane %v764, 2
        %v766 = vadd.f32 %v764, %v765
        %v767 = vrot.slane %v766, 1
        %v768 = vadd.f32 %v766, %v767
        %v769 = vadd.f32 %v709, %v711
        %v770 = vrot.slane %v769, 4
        %v771 = vadd.f32 %v769, %v770
        %v772 = vrot.slane %v771, 2
        %v773 = vadd.f32 %v771, %v772
        %v774 = vrot.slane %v773, 1
        %v775 = vadd.f32 %v773, %v774
        %v776 = vadd.f32 %v710, %v712
        %v777 = vrot.slane %v776, 4
        %v778 = vadd.f32 %v776, %v777
        %v779 = vrot.slane %v778, 2
        %v780 = vadd.f32 %v778, %v779
        %v781 = vrot.slane %v780, 1
        %v782 = vadd.f32 %v780, %v781
        %v791 = vcombine.low %v719, %v726
        %v792 = vcombine.low %v733, %v740
        %v793 = vcombine.low %v747, %v754
        %v794 = vcombine.low %v761, %v768
        %v795 = vrot.slane %v792, 7
        %vm796 = vcmask 1041409
        %v797 = vsel %vm796, %v795, %v791
        %vm798 = vcmask 1045509
        %v799 = vsel %vm798, %v795, %v797
        %v800 = vrot.slane %v793, 6
        %vm801 = vcmask 1042434
        %v802 = vsel %vm801, %v800, %v799
        %vm803 = vcmask 1046534
        %v804 = vsel %vm803, %v800, %v802
        %v805 = vrot.slane %v794, 5
        %vm806 = vcmask 1043459
        %v807 = vsel %vm806, %v805, %v804
        %vm808 = vcmask 1047559
        %v809 = vsel %vm808, %v805, %v807
        %811 = vst [vmem:[%s264] sm:$0xff] %v809
        %v814 = vcombine.low %v775, %v782
        %v816 = vunpack.c.l.s4 1966171168
        %v817 = vunpack.c.0.s8 %v816
        %v818 = vlaneseq
        %v819 = vshrl.u32 %v818, 7
        %v820 = vsub.s32 %v817, %v819
        %v821 = vrot.slane %v814, %v820
        %v823 = vunpack.c.l.s4 1966171168
        %v824 = vunpack.c.0.s8 %v823
        %v825 = vlaneseq
        %v826 = vshrl.u32 %v825, 7
        %v827 = vsub.s32 %v824, %v826
        %v828 = vrot.slane %v821, %v827
        %v830 = vlaneseq
        %vm831 = vcmp.ge.s32.totalorder %v830, 0
        %vm832 = vcmp.lt.s32.totalorder %v830, 256
        %vm833 = vmand %vm831, %vm832
        %834 = vst.msk [vmem:[%s271] sm:$0x3] %vm833, %v828
        %s835 = sand.u32 %s119, 1
        %s836 = scalar_lea.sflag [#allocation4], %s835
        %s837 = sand.u32 %s119, 1
        %s838 = smul.addr %s837, 8
        %s839 = scalar_lea.vmem [#allocation9], %s838
        %s840 = sand.u32 %s147, 1
        %s841 = scalar_lea.sflag [#allocation11], %s840
        %s842 = sand.u32 %s147, 1
        %s843 = smul.addr %s842, 2
        %s844 = scalar_lea.vmem [#allocation10], %s843
        // Predicated region
        $region45: #{tpu_custom_call.1} parent=31 // pred_check
          %p845 = pneg %p129
        $region46: #{tpu_custom_call.1} parent=31 // pred_check_branch
          %847 = sbr.rel (%p845) target = $region48
        $region47: #{tpu_custom_call.1} parent=31 // pred_region
          %s848 = smul.u32 2, %s32
          %s850 = ssub.s32 128, 128
          %851 = vsyncadd %s836, %s850
          %s852 = smul.addr %s31, 2
          %s853 = sadd.s32 %s848, %s852
          %s854 = smul.addr %s853, 64
          %s855 = scalar_lea.hbm %s3, %s854
          %s857 = sshll.u32 %s839, 4
          %s858 = int_to_ptr.vmem [resolvable:$true] %s857
          %860 = dma.vmem_to_hbm [thread:$0]  %s858, 128, %s855, %s836
        $region48: #{tpu_custom_call.1} parent=31 // pred_fallthru
          _
        // Predicated region
        $region49: #{tpu_custom_call.1} parent=31 // pred_check
          %p861 = pneg %p157
        $region50: #{tpu_custom_call.1} parent=31 // pred_check_branch
          %863 = sbr.rel (%p861) target = $region52
        $region51: #{tpu_custom_call.1} parent=31 // pred_region
          %s864 = smul.u32 2, %s32
          %s866 = ssub.s32 32, 32
          %867 = vsyncadd %s841, %s866
          %s868 = smul.addr %s31, 2
          %s869 = sadd.s32 %s864, %s868
          %s870 = smul.addr %s869, 16
          %s871 = scalar_lea.hbm %s4, %s870
          %s873 = sshll.u32 %s844, 4
          %s874 = int_to_ptr.vmem [resolvable:$true] %s873
          %876 = dma.vmem_to_hbm [thread:$0]  %s874, 32, %s871, %s841
        $region52: #{tpu_custom_call.1} parent=31 // pred_fallthru
          _
      $region32: #{tpu_custom_call.1} parent=5 // pred_fallthru
        _
      %p877 = scmp.le.s32.totalorder 2, %s22
      // Predicated region
      $region53: #{tpu_custom_call.1} parent=5 // pred_check
        %p878 = pneg %p877
      $region54: #{tpu_custom_call.1} parent=5 // pred_check_branch
        %880 = sbr.rel (%p878) target = $region56
      $region55: #{tpu_custom_call.1} parent=5 // pred_region
        %s881 = ssub.s32 %s22, 2
        // Predicated region
        $region57: #{tpu_custom_call.1} parent=55 // pred_check
          %p882 = pneg %p135
        $region58: #{tpu_custom_call.1} parent=55 // pred_check_branch
          %884 = sbr.rel (%p882) target = $region60
        $region59: #{tpu_custom_call.1} parent=55 // pred_region
          %s885 = sand.u32 %s120, 1
          %s886 = scalar_lea.sflag [#allocation4], %s885
          %s887 = sand.u32 %s120, 1
          %s888 = smul.addr %s887, 8
          %s889 = scalar_lea.vmem [#allocation9], %s888
          %890 = dma.done %s886, 128
        $region60: #{tpu_custom_call.1} parent=55 // pred_fallthru
          _
        // Predicated region
        $region61: #{tpu_custom_call.1} parent=55 // pred_check
          %p891 = pneg %p163
        $region62: #{tpu_custom_call.1} parent=55 // pred_check_branch
          %893 = sbr.rel (%p891) target = $region64
        $region63: #{tpu_custom_call.1} parent=55 // pred_region
          %s894 = sand.u32 %s148, 1
          %s895 = scalar_lea.sflag [#allocation11], %s894
          %s896 = sand.u32 %s148, 1
          %s897 = smul.addr %s896, 2
          %s898 = scalar_lea.vmem [#allocation10], %s897
          %899 = dma.done %s895, 32
        $region64: #{tpu_custom_call.1} parent=55 // pred_fallthru
          _
      $region56: #{tpu_custom_call.1} parent=5 // pred_fallthru
        _
    $region6: #{tpu_custom_call.1} parent=1 // loop_footer
      %s26 = sadd.s32 1, %s22
    $region7: #{tpu_custom_call.1} parent=1 // loop_footer_branch
      %21 = sbr.rel target = $region3
    $region8: #{tpu_custom_call.1} parent=1 // loop_exit
      _
    %900 = vsyncpa [#allocation3], 1
    %s901 = scalar_lea.sflag [#allocation3], 1
    %902 = vsyncpa %s901, 1
    %903 = vsyncpa [#allocation8], 1
    %904 = vsyncpa [#allocation4], 1
    %s905 = scalar_lea.sflag [#allocation4], 1
    %906 = vsyncpa %s905, 1
    %907 = vsyncpa [#allocation11], 1
    %s908 = scalar_lea.sflag [#allocation11], 1
    %909 = vsyncpa %s908, 1
    %910 = vsyncpa [#allocation5], 1
    %s911 = scalar_lea.sflag [#allocation5], 1
    %912 = vsyncpa %s911, 1

</llo_original>
